<compile_context>
chip_gen: v7x
topology: tpu7x:2x2x1
jax: 0.10.0
libtpu: 0.0.40
codegen_flags: <defaults>
</compile_context>

<pallas_src>
import functools
import math

import jax
import jax.numpy as jnp
from jax.experimental import pallas as pl
from jax.experimental.pallas import tpu as pltpu


# ---------------------------------------------------------------------------
# Pallas kernel: one full TransformerBlock for one packed batch tile.
# ---------------------------------------------------------------------------
def transformer_block_kernel(
    x_ref,                      # (B, S, E) activations bf16 (query = key = value)
    wq_ref, wk_ref, wv_ref,     # (D, D) shared per-head weights, (in,out), bf16
    wo_ref, bo_ref,             # (H, D, E) per-head output proj bf16, (1, E) f32
    g1_ref, b1_ref,             # layer_norm_1 gamma/beta (1, E) f32
    w1_ref, bf1_ref,            # ff linear 1: (E, H_ff) bf16, (1, H_ff) f32
    w2_ref, bf2_ref,            # ff linear 2: (H_ff, E) bf16, (1, E) f32
    g2_ref, b2_ref,             # layer_norm_2 gamma/beta (1, E) f32
    o_ref,                      # (B, S, E) output bf16
    *, heads, eps=1e-5,
):
    B, S, E = x_ref.shape
    H = heads
    D = E // H
    rows = B * S
    Z = H * B
    bf16 = jnp.bfloat16
    f32 = jnp.float32

    xb = x_ref[...]                                  # (B, S, E) bf16
    x2 = xb.reshape(rows, E)                         # (rows, E) bf16 (row = b*S + s)
    x32 = x2.astype(f32)                             # residual path in f32

    # ---- single head-major relayout; q/k/v inherit the layout ---------------
    xh = jnp.transpose(x2.reshape(rows, H, D), (1, 0, 2))    # (H, rows, D) bf16
    xh = xh.reshape(H * rows, D)                             # (H*B*S, D) bf16

    # ---- shared per-head Q/K/V projections: bf16 MXU, f32 accumulate --------
    q = jnp.dot(xh, wq_ref[...], preferred_element_type=f32)   # (H*rows, D) f32
    k = jnp.dot(xh, wk_ref[...], preferred_element_type=f32)
    v = jnp.dot(xh, wv_ref[...], preferred_element_type=f32)

    # Reference scales by 1/sqrt(embeddings_size) (NOT head_dim) -- keep it.
    scale = 1.0 / math.sqrt(float(E))
    qh = (q * scale).astype(bf16).reshape(Z, S, D)   # z = h*B + b
    kh = k.astype(bf16).reshape(Z, S, D)
    vh = v.astype(bf16).reshape(Z, S, D)

    # ---- attention, batched over z = head*batch (no per-head loop) ----------
    s = jnp.einsum("zqd,zkd->zqk", qh, kh, preferred_element_type=f32)  # (Z,S,S)
    s = s - jnp.max(s, axis=-1, keepdims=True)
    p = jnp.exp(s)
    # EUP approximate reciprocal for the softmax denominator (otherwise-idle slot).
    p = p * pl.reciprocal(jnp.sum(p, axis=-1, keepdims=True), approx=True)
    ctx = jnp.einsum("zqk,zkd->zqd", p.astype(bf16), vh,
                     preferred_element_type=f32)                        # (Z,S,D)

    # ---- output projection with the head-merge transpose absorbed -----------
    ctx_h = ctx.astype(bf16).reshape(H, rows, D)
    proj = jnp.einsum("hrd,hde->hre", ctx_h, wo_ref[...],
                      preferred_element_type=f32)                       # (H,rows,E)
    attention = jnp.sum(proj, axis=0) + bo_ref[...]                     # (rows, E)

    def layer_norm(y, g, b):
        mu = jnp.mean(y, axis=-1, keepdims=True)
        var = jnp.mean((y - mu) ** 2, axis=-1, keepdims=True)  # biased (PyTorch)
        return (y - mu) * jax.lax.rsqrt(var + eps) * g + b

    # residual + LN 1   (dropout == identity in eval mode)
    x1 = layer_norm(attention + x32, g1_ref[...], b1_ref[...])

    # feed forward: Linear -> ReLU -> Linear, bf16 MXU operands, f32 accumulate
    h1 = jnp.dot(x1.astype(bf16), w1_ref[...],
                 preferred_element_type=f32) + bf1_ref[...]
    h1 = jnp.maximum(h1, 0.0)
    ff = jnp.dot(h1.astype(bf16), w2_ref[...],
                 preferred_element_type=f32) + bf2_ref[...]

    # residual + LN 2
    out = layer_norm(ff + x1, g2_ref[...], b2_ref[...])
    o_ref[...] = out.reshape(B, S, E).astype(o_ref.dtype)


# ---------------------------------------------------------------------------
# Batch-tile selection: big MXU M-dim first; only split the grid when each
# step still has >= 256 rows (keeps both v7x TCs busy without shrinking tiles
# on single-TC v5e/v6e).
# ---------------------------------------------------------------------------
def _pick_batch_tile(n, s, target_rows=512, min_rows_per_step=256):
    candidates = [t for t in range(1, n + 1) if n % t == 0 and t * s <= target_rows]
    if not candidates:
        return 1
    best = max(candidates)
    split = [t for t in candidates if (n // t) >= 2 and t * s >= min_rows_per_step]
    if split:
        best = max(split)
    return best


@functools.lru_cache(maxsize=1)
def _vmem_limit_bytes():
    # Leave headroom below physical VMEM; adapts across v5e/v6e (128 MiB) / v7x (64 MiB).
    default = 64 * 1024 * 1024
    try:
        info = pltpu.get_tpu_info()
        cap = int(getattr(info, "vmem_capacity_bytes", default))
    except Exception:
        cap = default
    return min(int(cap * 0.85), 110 * 1024 * 1024)


# ---------------------------------------------------------------------------
# Wrapper: one TransformerBlock over the whole batch (grid over batch tiles).
# Weights arrive already in kernel layout (see prepare_params) -> no per-call prep.
# ---------------------------------------------------------------------------
def transformer_block(x, kernel_layer, heads):
    N, S, E = x.shape
    (wq_t, wk_t, wv_t, wo_h, bo, g1, be1, w1_t, bf1, w2_t, bf2, g2, be2) = kernel_layer
    D = E // heads
    hidden = w1_t.shape[1]
    B = _pick_batch_tile(N, S)

    kernel = functools.partial(transformer_block_kernel, heads=heads)

    def full_spec(shape):
        # whole (small) weight tensor resident in VMEM, same block every grid step
        return pl.BlockSpec(shape, lambda i: (0,) * len(shape))

    return pl.pallas_call(
        kernel,
        out_shape=jax.ShapeDtypeStruct((N, S, E), jnp.bfloat16),
        grid=(N // B,),
        in_specs=[
            pl.BlockSpec((B, S, E), lambda i: (i, 0, 0)),        # packed batch tile
            full_spec((D, D)), full_spec((D, D)), full_spec((D, D)),   # shared qkv
            full_spec((heads, D, E)), full_spec((1, E)),         # wo per-head, bo
            full_spec((1, E)), full_spec((1, E)),                # ln1 gamma/beta
            full_spec((E, hidden)), full_spec((1, hidden)),      # ff1
            full_spec((hidden, E)), full_spec((1, E)),           # ff2
            full_spec((1, E)), full_spec((1, E)),                # ln2 gamma/beta
        ],
        out_specs=pl.BlockSpec((B, S, E), lambda i: (i, 0, 0)),
        compiler_params=pltpu.CompilerParams(
            dimension_semantics=("parallel",),
            vmem_limit_bytes=_vmem_limit_bytes(),
        ),
    )(x, wq_t, wk_t, wv_t, wo_h, bo, g1, be1, w1_t, bf1, w2_t, bf2, g2, be2)


# ---------------------------------------------------------------------------
# One-time weight preprocessing (hoisted out of the forward path).
# ---------------------------------------------------------------------------
def prepare_params(params):
    heads = params["heads"]
    prepared = {
        "heads": heads,
        "word_embedding": params["word_embedding"],
        "position_embedding": params["position_embedding"],
        "layers": [],
    }
    for (wq, wk, wv, wo, bo, g1, be1, w1, bf1, w2, bf2, g2, be2) in params["layers"]:
        E = wo.shape[0]
        D = wq.shape[0]
        prepared["layers"].append((
            wq.T, wk.T, wv.T,                 # (D, D) bf16, (in, out)
            wo.T.reshape(heads, D, E),        # (H, D, E) bf16 (head-split of wo.T)
            bo, g1, be1,
            w1.T, bf1,                        # (E, H_ff) bf16
            w2.T, bf2,                        # (H_ff, E) bf16
            g2, be2,
        ))
    return prepared


# ---------------------------------------------------------------------------
# Full Encoder forward (uses prepared / kernel-layout params).
# ---------------------------------------------------------------------------
def encoder_forward(tokens, prepared):
    word_emb = prepared["word_embedding"]      # (vocab, E) f32
    pos_emb = prepared["position_embedding"]   # (max_len, E) f32
    N, S = tokens.shape

    positions = jnp.arange(S, dtype=jnp.int32)
    # embedding gather + add is glue; stays in plain JAX.  Inter-layer
    # activations are bf16 (halves HBM activation traffic).
    out = (word_emb[tokens] + pos_emb[positions][None, :, :]).astype(jnp.bfloat16)
    # TODO(synk): dropout is identity (eval mode); no RNG dropout implemented.

    for layer in prepared["layers"]:
        out = transformer_block(out, layer, heads=prepared["heads"])
    return out


# ---------------------------------------------------------------------------
# Pure-JAX f32 reference (correctness sanity check only; uses original layout).
# ---------------------------------------------------------------------------
def encoder_reference(tokens, params):
    word_emb = params["word_embedding"]
    pos_emb = params["position_embedding"]
    heads = params["heads"]
    N, S = tokens.shape
    out = word_emb[tokens] + pos_emb[jnp.arange(S)][None, :, :]

    def layer_norm(y, g, b, eps=1e-5):
        mu = jnp.mean(y, axis=-1, keepdims=True)
        var = jnp.mean((y - mu) ** 2, axis=-1, keepdims=True)
        return (y - mu) / jnp.sqrt(var + eps) * g + b

    for (wq, wk, wv, wo, bo, g1, be1, w1, bf1, w2, bf2, g2, be2) in params["layers"]:
        wq, wk, wv, wo, w1, w2 = (t.astype(jnp.float32)
                                  for t in (wq, wk, wv, wo, w1, w2))
        E = out.shape[-1]
        D = E // heads
        xh = out.reshape(N, S, heads, D)
        q = jnp.einsum("nshd,ed->nshe", xh, wq)
        k = jnp.einsum("nshd,ed->nshe", xh, wk)
        v = jnp.einsum("nshd,ed->nshe", xh, wv)
        scores = jnp.einsum("nqhd,nkhd->nhqk", q, k) / math.sqrt(float(E))
        attn = jax.nn.softmax(scores, axis=-1)
        ctx = jnp.einsum("nhqk,nkhd->nqhd", attn, v).reshape(N, S, E)
        attention = ctx @ wo.T + bo[0]
        x1 = layer_norm(attention + out, g1[0], be1[0])
        ff = jnp.maximum(x1 @ w1.T + bf1[0], 0.0) @ w2.T + bf2[0]
        out = layer_norm(ff + x1, g2[0], be2[0])
    return out


# ---------------------------------------------------------------------------
# Deterministic parameter init (weight matrices stored bf16, rest f32).
# ---------------------------------------------------------------------------
def init_params(key, vocab_size, embed, n_layers, heads, forward_expansion, max_length):
    D = embed // heads
    Hff = forward_expansion * embed
    keys = jax.random.split(key, 2 + n_layers)
    bf16 = jnp.bfloat16

    params = {
        "heads": heads,
        "word_embedding": 0.02 * jax.random.normal(keys[0], (vocab_size, embed), jnp.float32),
        "position_embedding": 0.02 * jax.random.normal(keys[1], (max_length, embed), jnp.float32),
        "layers": [],
    }
    for l in range(n_layers):
        ks = jax.random.split(keys[2 + l], 8)
        wq = (0.1 * jax.random.normal(ks[0], (D, D), jnp.float32)).astype(bf16)
        wk = (0.1 * jax.random.normal(ks[1], (D, D), jnp.float32)).astype(bf16)
        wv = (0.1 * jax.random.normal(ks[2], (D, D), jnp.float32)).astype(bf16)
        wo = (0.1 * jax.random.normal(ks[3], (embed, embed), jnp.float32)).astype(bf16)
        bo = 0.01 * jax.random.normal(ks[4], (1, embed), jnp.float32)
        g1 = jnp.ones((1, embed), jnp.float32)
        be1 = jnp.zeros((1, embed), jnp.float32)
        w1 = (0.1 * jax.random.normal(ks[5], (Hff, embed), jnp.float32)).astype(bf16)
        bf1 = 0.01 * jax.random.normal(ks[6], (1, Hff), jnp.float32)
        w2 = (0.1 * jax.random.normal(ks[7], (embed, Hff), jnp.float32)).astype(bf16)
        bf2 = jnp.zeros((1, embed), jnp.float32)
        g2 = jnp.ones((1, embed), jnp.float32)
        be2 = jnp.zeros((1, embed), jnp.float32)
        params["layers"].append(
            (wq, wk, wv, wo, bo, g1, be1, w1, bf1, w2, bf2, g2, be2)
        )
    return params


if __name__ == "__main__":
    # small shapes consistent with the module's forward
    vocab_size = 50
    embed = 32
    n_layers = 2
    heads = 4
    forward_expansion = 2
    max_length = 16
    N, S = 2, 8

    key = jax.random.PRNGKey(0)
    pkey, tkey = jax.random.split(key)
    params = init_params(pkey, vocab_size, embed, n_layers, heads,
                         forward_expansion, max_length)
    kparams = prepare_params(params)          # one-time weight layout prep
    tokens = jax.random.randint(tkey, (N, S), 0, vocab_size, dtype=jnp.int32)

    out = encoder_forward(tokens, kparams)
    out = jax.block_until_ready(out)

    ref = encoder_reference(tokens, params)
    assert out.shape == (N, S, embed)
    assert out.dtype == jnp.bfloat16
    # tolerance covers bf16 MXU operands, bf16 inter-layer activations, and the
    # approximate EUP reciprocal in the softmax denominator (weights identical
    # bf16 values on both sides).
    assert jnp.allclose(out.astype(jnp.float32), ref, rtol=5e-2, atol=5e-2), \
        "mismatch vs JAX reference"

    print("KERNEL_OK")
</pallas_src>

<mosaic_0001>
module attributes {stable_mosaic.version = 11 : i64} {
  func.func @transformer_block_kernel(%arg0: i32, %arg1: memref<2x8x32xbf16, #tpu.memory_space<vmem>>, %arg2: memref<8x8xbf16, #tpu.memory_space<vmem>>, %arg3: memref<8x8xbf16, #tpu.memory_space<vmem>>, %arg4: memref<8x8xbf16, #tpu.memory_space<vmem>>, %arg5: memref<4x8x32xbf16, #tpu.memory_space<vmem>>, %arg6: memref<1x32xf32, #tpu.memory_space<vmem>>, %arg7: memref<1x32xf32, #tpu.memory_space<vmem>>, %arg8: memref<1x32xf32, #tpu.memory_space<vmem>>, %arg9: memref<32x64xbf16, #tpu.memory_space<vmem>>, %arg10: memref<1x64xf32, #tpu.memory_space<vmem>>, %arg11: memref<64x32xbf16, #tpu.memory_space<vmem>>, %arg12: memref<1x32xf32, #tpu.memory_space<vmem>>, %arg13: memref<1x32xf32, #tpu.memory_space<vmem>>, %arg14: memref<1x32xf32, #tpu.memory_space<vmem>>, %arg15: memref<2x8x32xbf16, #tpu.memory_space<vmem>>) attributes {dimension_semantics = [#tpu.dimension_semantics<parallel>], iteration_bounds = array<i64: 1>, scalar_prefetch = 0 : i64, scratch_operands = 0 : i64, tpu.core_type = #tpu.core_type<tc>, window_params = [{transform_indices = @transform_0, window_bounds = array<i64: 2, 8, 32>}, {pipeline_mode = #tpu.pipeline_mode<synchronous>, transform_indices = @transform_1, window_bounds = array<i64: 8, 8>}, {pipeline_mode = #tpu.pipeline_mode<synchronous>, transform_indices = @transform_2, window_bounds = array<i64: 8, 8>}, {pipeline_mode = #tpu.pipeline_mode<synchronous>, transform_indices = @transform_3, window_bounds = array<i64: 8, 8>}, {pipeline_mode = #tpu.pipeline_mode<synchronous>, transform_indices = @transform_4, window_bounds = array<i64: 4, 8, 32>}, {pipeline_mode = #tpu.pipeline_mode<synchronous>, transform_indices = @transform_5, window_bounds = array<i64: 1, 32>}, {pipeline_mode = #tpu.pipeline_mode<synchronous>, transform_indices = @transform_6, window_bounds = array<i64: 1, 32>}, {pipeline_mode = #tpu.pipeline_mode<synchronous>, transform_indices = @transform_7, window_bounds = array<i64: 1, 32>}, {pipeline_mode = #tpu.pipeline_mode<synchronous>, transform_indices = @transform_8, window_bounds = array<i64: 32, 64>}, {pipeline_mode = #tpu.pipeline_mode<synchronous>, transform_indices = @transform_9, window_bounds = array<i64: 1, 64>}, {pipeline_mode = #tpu.pipeline_mode<synchronous>, transform_indices = @transform_10, window_bounds = array<i64: 64, 32>}, {pipeline_mode = #tpu.pipeline_mode<synchronous>, transform_indices = @transform_11, window_bounds = array<i64: 1, 32>}, {pipeline_mode = #tpu.pipeline_mode<synchronous>, transform_indices = @transform_12, window_bounds = array<i64: 1, 32>}, {pipeline_mode = #tpu.pipeline_mode<synchronous>, transform_indices = @transform_13, window_bounds = array<i64: 1, 32>}, {transform_indices = @transform_14, window_bounds = array<i64: 2, 8, 32>}]} {
    %c0 = arith.constant 0 : index
    %c0_0 = arith.constant 0 : index
    %c0_1 = arith.constant 0 : index
    %0 = vector.load %arg1[%c0, %c0_0, %c0_1] : memref<2x8x32xbf16, #tpu.memory_space<vmem>>, vector<2x8x32xbf16>
    %1 = vector.shape_cast %0 : vector<2x8x32xbf16> to vector<16x32xbf16>
    %2 = arith.extf %1 : vector<16x32xbf16> to vector<16x32xf32>
    %3 = vector.shape_cast %1 : vector<16x32xbf16> to vector<16x4x8xbf16>
    %4 = tpu.transpose %3, [1, 0, 2] : vector<16x4x8xbf16> -> vector<4x16x8xbf16>
    %5 = vector.shape_cast %4 : vector<4x16x8xbf16> to vector<64x8xbf16>
    %c0_2 = arith.constant 0 : index
    %c0_3 = arith.constant 0 : index
    %6 = vector.load %arg2[%c0_2, %c0_3] : memref<8x8xbf16, #tpu.memory_space<vmem>>, vector<8x8xbf16>
    %cst = arith.constant dense<0.000000e+00> : vector<64x8xf32>
    %7 = tpu.matmul %5, %6, %cst {dimension_numbers = #tpu.dot_dimension_numbers<[1], [0], [0], [1], [0, 0, 1, 1], [], []>} : vector<64x8xbf16>, vector<8x8xbf16>, vector<64x8xf32> -> vector<64x8xf32>
    %c0_4 = arith.constant 0 : index
    %c0_5 = arith.constant 0 : index
    %8 = vector.load %arg3[%c0_4, %c0_5] : memref<8x8xbf16, #tpu.memory_space<vmem>>, vector<8x8xbf16>
    %cst_6 = arith.constant dense<0.000000e+00> : vector<64x8xf32>
    %9 = tpu.matmul %5, %8, %cst_6 {dimension_numbers = #tpu.dot_dimension_numbers<[1], [0], [0], [1], [0, 0, 1, 1], [], []>} : vector<64x8xbf16>, vector<8x8xbf16>, vector<64x8xf32> -> vector<64x8xf32>
    %c0_7 = arith.constant 0 : index
    %c0_8 = arith.constant 0 : index
    %10 = vector.load %arg4[%c0_7, %c0_8] : memref<8x8xbf16, #tpu.memory_space<vmem>>, vector<8x8xbf16>
    %cst_9 = arith.constant dense<0.000000e+00> : vector<64x8xf32>
    %11 = tpu.matmul %5, %10, %cst_9 {dimension_numbers = #tpu.dot_dimension_numbers<[1], [0], [0], [1], [0, 0, 1, 1], [], []>} : vector<64x8xbf16>, vector<8x8xbf16>, vector<64x8xf32> -> vector<64x8xf32>
    %cst_10 = arith.constant 0.176776692 : f32
    %12 = vector.broadcast %cst_10 : f32 to vector<64x8xf32>
    %13 = arith.mulf %7, %12 : vector<64x8xf32>
    %14 = arith.truncf %13 : vector<64x8xf32> to vector<64x8xbf16>
    %15 = vector.shape_cast %14 : vector<64x8xbf16> to vector<8x8x8xbf16>
    %16 = arith.truncf %9 : vector<64x8xf32> to vector<64x8xbf16>
    %17 = vector.shape_cast %16 : vector<64x8xbf16> to vector<8x8x8xbf16>
    %18 = arith.truncf %11 : vector<64x8xf32> to vector<64x8xbf16>
    %19 = vector.shape_cast %18 : vector<64x8xbf16> to vector<8x8x8xbf16>
    "tpu.trace_start"() <{level = 10 : i32, message = "zqd,zkd->zqk"}> : () -> ()
    %cst_11 = arith.constant dense<0.000000e+00> : vector<8x8x8xf32>
    %20 = tpu.matmul %15, %17, %cst_11 {dimension_numbers = #tpu.dot_dimension_numbers<[2], [2], [1], [1], [0, 0, 0, 1, 1, 1], [0], [0]>} : vector<8x8x8xbf16>, vector<8x8x8xbf16>, vector<8x8x8xf32> -> vector<8x8x8xf32>
    "tpu.trace_stop"() : () -> ()
    %cst_12 = arith.constant dense<0xFF800000> : vector<8x8xf32>
    %21 = vector.multi_reduction <maximumf>, %20, %cst_12 [2] : vector<8x8x8xf32> to vector<8x8xf32>
    %22 = vector.shape_cast %21 : vector<8x8xf32> to vector<8x8x1xf32>
    %23 = vector.broadcast %22 : vector<8x8x1xf32> to vector<8x8x8xf32>
    %24 = arith.subf %20, %23 : vector<8x8x8xf32>
    %25 = math.exp %24 : vector<8x8x8xf32>
    %cst_13 = arith.constant dense<0.000000e+00> : vector<8x8xf32>
    %26 = vector.multi_reduction <add>, %25, %cst_13 [2] : vector<8x8x8xf32> to vector<8x8xf32>
    %27 = vector.shape_cast %26 : vector<8x8xf32> to vector<8x8x1xf32>
    %28 = tpu.reciprocal %27 {approx = true} : vector<8x8x1xf32> -> vector<8x8x1xf32>
    %29 = vector.broadcast %28 : vector<8x8x1xf32> to vector<8x8x8xf32>
    %30 = arith.mulf %25, %29 : vector<8x8x8xf32>
    %31 = arith.truncf %30 : vector<8x8x8xf32> to vector<8x8x8xbf16>
    "tpu.trace_start"() <{level = 10 : i32, message = "zqk,zkd->zqd"}> : () -> ()
    %cst_14 = arith.constant dense<0.000000e+00> : vector<8x8x8xf32>
    %32 = tpu.matmul %31, %19, %cst_14 {dimension_numbers = #tpu.dot_dimension_numbers<[2], [1], [1], [2], [0, 0, 0, 1, 1, 2], [0], [0]>} : vector<8x8x8xbf16>, vector<8x8x8xbf16>, vector<8x8x8xf32> -> vector<8x8x8xf32>
    "tpu.trace_stop"() : () -> ()
    %33 = arith.truncf %32 : vector<8x8x8xf32> to vector<8x8x8xbf16>
    %34 = vector.shape_cast %33 : vector<8x8x8xbf16> to vector<4x16x8xbf16>
    %c0_15 = arith.constant 0 : index
    %c0_16 = arith.constant 0 : index
    %c0_17 = arith.constant 0 : index
    %35 = vector.load %arg5[%c0_15, %c0_16, %c0_17] : memref<4x8x32xbf16, #tpu.memory_space<vmem>>, vector<4x8x32xbf16>
    "tpu.trace_start"() <{level = 10 : i32, message = "hrd,hde->hre"}> : () -> ()
    %cst_18 = arith.constant dense<0.000000e+00> : vector<4x16x32xf32>
    %36 = tpu.matmul %34, %35, %cst_18 {dimension_numbers = #tpu.dot_dimension_numbers<[2], [1], [1], [2], [0, 0, 0, 1, 1, 2], [0], [0]>} : vector<4x16x8xbf16>, vector<4x8x32xbf16>, vector<4x16x32xf32> -> vector<4x16x32xf32>
    "tpu.trace_stop"() : () -> ()
    %cst_19 = arith.constant dense<0.000000e+00> : vector<16x32xf32>
    %37 = vector.multi_reduction <add>, %36, %cst_19 [0] : vector<4x16x32xf32> to vector<16x32xf32>
    %c0_20 = arith.constant 0 : index
    %c0_21 = arith.constant 0 : index
    %38 = vector.load %arg6[%c0_20, %c0_21] : memref<1x32xf32, #tpu.memory_space<vmem>>, vector<1x32xf32>
    %39 = vector.broadcast %38 : vector<1x32xf32> to vector<16x32xf32>
    %40 = arith.addf %37, %39 : vector<16x32xf32>
    %41 = arith.addf %40, %2 : vector<16x32xf32>
    %c0_22 = arith.constant 0 : index
    %c0_23 = arith.constant 0 : index
    %42 = vector.load %arg7[%c0_22, %c0_23] : memref<1x32xf32, #tpu.memory_space<vmem>>, vector<1x32xf32>
    %c0_24 = arith.constant 0 : index
    %c0_25 = arith.constant 0 : index
    %43 = vector.load %arg8[%c0_24, %c0_25] : memref<1x32xf32, #tpu.memory_space<vmem>>, vector<1x32xf32>
    %cst_26 = arith.constant dense<0.000000e+00> : vector<16xf32>
    %44 = vector.multi_reduction <add>, %41, %cst_26 [1] : vector<16x32xf32> to vector<16xf32>
    %45 = vector.shape_cast %44 : vector<16xf32> to vector<16x1xf32>
    %cst_27 = arith.constant 3.200000e+01 : f32
    %46 = vector.broadcast %cst_27 : f32 to vector<16x1xf32>
    %47 = arith.divf %45, %46 : vector<16x1xf32>
    %48 = vector.broadcast %47 : vector<16x1xf32> to vector<16x32xf32>
    %49 = arith.subf %41, %48 : vector<16x32xf32>
    %50 = arith.mulf %49, %49 : vector<16x32xf32>
    %cst_28 = arith.constant dense<0.000000e+00> : vector<16xf32>
    %51 = vector.multi_reduction <add>, %50, %cst_28 [1] : vector<16x32xf32> to vector<16xf32>
    %52 = vector.shape_cast %51 : vector<16xf32> to vector<16x1xf32>
    %cst_29 = arith.constant 3.200000e+01 : f32
    %53 = vector.broadcast %cst_29 : f32 to vector<16x1xf32>
    %54 = arith.divf %52, %53 : vector<16x1xf32>
    %55 = vector.broadcast %47 : vector<16x1xf32> to vector<16x32xf32>
    %56 = arith.subf %41, %55 : vector<16x32xf32>
    %cst_30 = arith.constant 9.99999974E-6 : f32
    %57 = vector.broadcast %cst_30 : f32 to vector<16x1xf32>
    %58 = arith.addf %54, %57 : vector<16x1xf32>
    %59 = math.rsqrt %58 : vector<16x1xf32>
    %60 = vector.broadcast %59 : vector<16x1xf32> to vector<16x32xf32>
    %61 = arith.mulf %56, %60 : vector<16x32xf32>
    %62 = vector.broadcast %42 : vector<1x32xf32> to vector<16x32xf32>
    %63 = arith.mulf %61, %62 : vector<16x32xf32>
    %64 = vector.broadcast %43 : vector<1x32xf32> to vector<16x32xf32>
    %65 = arith.addf %63, %64 : vector<16x32xf32>
    %66 = arith.truncf %65 : vector<16x32xf32> to vector<16x32xbf16>
    %c0_31 = arith.constant 0 : index
    %c0_32 = arith.constant 0 : index
    %67 = vector.load %arg9[%c0_31, %c0_32] : memref<32x64xbf16, #tpu.memory_space<vmem>>, vector<32x64xbf16>
    %cst_33 = arith.constant dense<0.000000e+00> : vector<16x64xf32>
    %68 = tpu.matmul %66, %67, %cst_33 {dimension_numbers = #tpu.dot_dimension_numbers<[1], [0], [0], [1], [0, 0, 1, 1], [], []>} : vector<16x32xbf16>, vector<32x64xbf16>, vector<16x64xf32> -> vector<16x64xf32>
    %c0_34 = arith.constant 0 : index
    %c0_35 = arith.constant 0 : index
    %69 = vector.load %arg10[%c0_34, %c0_35] : memref<1x64xf32, #tpu.memory_space<vmem>>, vector<1x64xf32>
    %70 = vector.broadcast %69 : vector<1x64xf32> to vector<16x64xf32>
    %71 = arith.addf %68, %70 : vector<16x64xf32>
    %cst_36 = arith.constant 0.000000e+00 : f32
    %72 = vector.broadcast %cst_36 : f32 to vector<16x64xf32>
    %73 = arith.maximumf %71, %72 : vector<16x64xf32>
    %74 = arith.truncf %73 : vector<16x64xf32> to vector<16x64xbf16>
    %c0_37 = arith.constant 0 : index
    %c0_38 = arith.constant 0 : index
    %75 = vector.load %arg11[%c0_37, %c0_38] : memref<64x32xbf16, #tpu.memory_space<vmem>>, vector<64x32xbf16>
    %cst_39 = arith.constant dense<0.000000e+00> : vector<16x32xf32>
    %76 = tpu.matmul %74, %75, %cst_39 {dimension_numbers = #tpu.dot_dimension_numbers<[1], [0], [0], [1], [0, 0, 1, 1], [], []>} : vector<16x64xbf16>, vector<64x32xbf16>, vector<16x32xf32> -> vector<16x32xf32>
    %c0_40 = arith.constant 0 : index
    %c0_41 = arith.constant 0 : index
    %77 = vector.load %arg12[%c0_40, %c0_41] : memref<1x32xf32, #tpu.memory_space<vmem>>, vector<1x32xf32>
    %78 = vector.broadcast %77 : vector<1x32xf32> to vector<16x32xf32>
    %79 = arith.addf %76, %78 : vector<16x32xf32>
    %80 = arith.addf %79, %65 : vector<16x32xf32>
    %c0_42 = arith.constant 0 : index
    %c0_43 = arith.constant 0 : index
    %81 = vector.load %arg13[%c0_42, %c0_43] : memref<1x32xf32, #tpu.memory_space<vmem>>, vector<1x32xf32>
    %c0_44 = arith.constant 0 : index
    %c0_45 = arith.constant 0 : index
    %82 = vector.load %arg14[%c0_44, %c0_45] : memref<1x32xf32, #tpu.memory_space<vmem>>, vector<1x32xf32>
    %cst_46 = arith.constant dense<0.000000e+00> : vector<16xf32>
    %83 = vector.multi_reduction <add>, %80, %cst_46 [1] : vector<16x32xf32> to vector<16xf32>
    %84 = vector.shape_cast %83 : vector<16xf32> to vector<16x1xf32>
    %cst_47 = arith.constant 3.200000e+01 : f32
    %85 = vector.broadcast %cst_47 : f32 to vector<16x1xf32>
    %86 = arith.divf %84, %85 : vector<16x1xf32>
    %87 = vector.broadcast %86 : vector<16x1xf32> to vector<16x32xf32>
    %88 = arith.subf %80, %87 : vector<16x32xf32>
    %89 = arith.mulf %88, %88 : vector<16x32xf32>
    %cst_48 = arith.constant dense<0.000000e+00> : vector<16xf32>
    %90 = vector.multi_reduction <add>, %89, %cst_48 [1] : vector<16x32xf32> to vector<16xf32>
    %91 = vector.shape_cast %90 : vector<16xf32> to vector<16x1xf32>
    %cst_49 = arith.constant 3.200000e+01 : f32
    %92 = vector.broadcast %cst_49 : f32 to vector<16x1xf32>
    %93 = arith.divf %91, %92 : vector<16x1xf32>
    %94 = vector.broadcast %86 : vector<16x1xf32> to vector<16x32xf32>
    %95 = arith.subf %80, %94 : vector<16x32xf32>
    %cst_50 = arith.constant 9.99999974E-6 : f32
    %96 = vector.broadcast %cst_50 : f32 to vector<16x1xf32>
    %97 = arith.addf %93, %96 : vector<16x1xf32>
    %98 = math.rsqrt %97 : vector<16x1xf32>
    %99 = vector.broadcast %98 : vector<16x1xf32> to vector<16x32xf32>
    %100 = arith.mulf %95, %99 : vector<16x32xf32>
    %101 = vector.broadcast %81 : vector<1x32xf32> to vector<16x32xf32>
    %102 = arith.mulf %100, %101 : vector<16x32xf32>
    %103 = vector.broadcast %82 : vector<1x32xf32> to vector<16x32xf32>
    %104 = arith.addf %102, %103 : vector<16x32xf32>
    %105 = vector.shape_cast %104 : vector<16x32xf32> to vector<2x8x32xf32>
    %106 = arith.truncf %105 : vector<2x8x32xf32> to vector<2x8x32xbf16>
    %c0_51 = arith.constant 0 : index
    %c0_52 = arith.constant 0 : index
    %c0_53 = arith.constant 0 : index
    %107 = vector.load %arg15[%c0_51, %c0_52, %c0_53] : memref<2x8x32xbf16, #tpu.memory_space<vmem>>, vector<2x8x32xbf16>
    tpu.vector_store %arg15[%c0_51, %c0_52, %c0_53], %106 {strides = array<i32>} : memref<2x8x32xbf16, #tpu.memory_space<vmem>>, vector<2x8x32xbf16>,
    return
  }
  func.func @transform_0(%arg0: i32) -> (i32, i32, i32) {
    %c0_i32 = arith.constant 0 : i32
    %c0_i32_0 = arith.constant 0 : i32
    %c0_i32_1 = arith.constant 0 : i32
    return %arg0, %c0_i32, %c0_i32_0 : i32, i32, i32
  }
  func.func @transform_1(%arg0: i32) -> (i32, i32) {
    %c0_i32 = arith.constant 0 : i32
    %c0_i32_0 = arith.constant 0 : i32
    %c0_i32_1 = arith.constant 0 : i32
    return %c0_i32, %c0_i32_0 : i32, i32
  }
  func.func @transform_2(%arg0: i32) -> (i32, i32) {
    %c0_i32 = arith.constant 0 : i32
    %c0_i32_0 = arith.constant 0 : i32
    %c0_i32_1 = arith.constant 0 : i32
    return %c0_i32, %c0_i32_0 : i32, i32
  }
  func.func @transform_3(%arg0: i32) -> (i32, i32) {
    %c0_i32 = arith.constant 0 : i32
    %c0_i32_0 = arith.constant 0 : i32
    %c0_i32_1 = arith.constant 0 : i32
    return %c0_i32, %c0_i32_0 : i32, i32
  }
  func.func @transform_4(%arg0: i32) -> (i32, i32, i32) {
    %c0_i32 = arith.constant 0 : i32
    %c0_i32_0 = arith.constant 0 : i32
    %c0_i32_1 = arith.constant 0 : i32
    %c0_i32_2 = arith.constant 0 : i32
    return %c0_i32, %c0_i32_0, %c0_i32_1 : i32, i32, i32
  }
  func.func @transform_5(%arg0: i32) -> (i32, i32) {
    %c0_i32 = arith.constant 0 : i32
    %c0_i32_0 = arith.constant 0 : i32
    %c0_i32_1 = arith.constant 0 : i32
    return %c0_i32, %c0_i32_0 : i32, i32
  }
  func.func @transform_6(%arg0: i32) -> (i32, i32) {
    %c0_i32 = arith.constant 0 : i32
    %c0_i32_0 = arith.constant 0 : i32
    %c0_i32_1 = arith.constant 0 : i32
    return %c0_i32, %c0_i32_0 : i32, i32
  }
  func.func @transform_7(%arg0: i32) -> (i32, i32) {
    %c0_i32 = arith.constant 0 : i32
    %c0_i32_0 = arith.constant 0 : i32
    %c0_i32_1 = arith.constant 0 : i32
    return %c0_i32, %c0_i32_0 : i32, i32
  }
  func.func @transform_8(%arg0: i32) -> (i32, i32) {
    %c0_i32 = arith.constant 0 : i32
    %c0_i32_0 = arith.constant 0 : i32
    %c0_i32_1 = arith.constant 0 : i32
    return %c0_i32, %c0_i32_0 : i32, i32
  }
  func.func @transform_9(%arg0: i32) -> (i32, i32) {
    %c0_i32 = arith.constant 0 : i32
    %c0_i32_0 = arith.constant 0 : i32
    %c0_i32_1 = arith.constant 0 : i32
    return %c0_i32, %c0_i32_0 : i32, i32
  }
  func.func @transform_10(%arg0: i32) -> (i32, i32) {
    %c0_i32 = arith.constant 0 : i32
    %c0_i32_0 = arith.constant 0 : i32
    %c0_i32_1 = arith.constant 0 : i32
    return %c0_i32, %c0_i32_0 : i32, i32
  }
  func.func @transform_11(%arg0: i32) -> (i32, i32) {
    %c0_i32 = arith.constant 0 : i32
    %c0_i32_0 = arith.constant 0 : i32
    %c0_i32_1 = arith.constant 0 : i32
    return %c0_i32, %c0_i32_0 : i32, i32
  }
  func.func @transform_12(%arg0: i32) -> (i32, i32) {
    %c0_i32 = arith.constant 0 : i32
    %c0_i32_0 = arith.constant 0 : i32
    %c0_i32_1 = arith.constant 0 : i32
    return %c0_i32, %c0_i32_0 : i32, i32
  }
  func.func @transform_13(%arg0: i32) -> (i32, i32) {
    %c0_i32 = arith.constant 0 : i32
    %c0_i32_0 = arith.constant 0 : i32
    %c0_i32_1 = arith.constant 0 : i32
    return %c0_i32, %c0_i32_0 : i32, i32
  }
  func.func @transform_14(%arg0: i32) -> (i32, i32, i32) {
    %c0_i32 = arith.constant 0 : i32
    %c0_i32_0 = arith.constant 0 : i32
    %c0_i32_1 = arith.constant 0 : i32
    return %arg0, %c0_i32, %c0_i32_0 : i32, i32, i32
  }
}

</mosaic_0001>

<llo_original>
// kernel: tpu_custom_call.1
$region0: #{tpu_custom_call.1}
  #allocation0 [shape = 'u32[]', space=smem, size = 0x4, offset = 0x4, fixed_abs, tag = 'smem constant byte address 0x4 - core index']
  #allocation1 [shape = 'u32[144,128]{1,0:T(1,128)}', space=vmem, size = 0x12000, scoped, tag = 'internal scratch']
  %s0 = inlined_call_operand.vmem [shape: bf16[2,8,32], index: 0, kind: input, shape index: {}]
  %s1 = inlined_call_operand.vmem [shape: bf16[8,8], index: 1, kind: input, shape index: {}]
  %s2 = inlined_call_operand.vmem [shape: bf16[8,8], index: 2, kind: input, shape index: {}]
  %s3 = inlined_call_operand.vmem [shape: bf16[8,8], index: 3, kind: input, shape index: {}]
  %s4 = inlined_call_operand.vmem [shape: bf16[4,8,32], index: 4, kind: input, shape index: {}]
  %s5 = inlined_call_operand.vmem [shape: f32[1,32], index: 5, kind: input, shape index: {}]
  %s6 = inlined_call_operand.vmem [shape: f32[1,32], index: 6, kind: input, shape index: {}]
  %s7 = inlined_call_operand.vmem [shape: f32[1,32], index: 7, kind: input, shape index: {}]
  %s8 = inlined_call_operand.vmem [shape: bf16[32,64], index: 8, kind: input, shape index: {}]
  %s9 = inlined_call_operand.vmem [shape: f32[1,64], index: 9, kind: input, shape index: {}]
  %s10 = inlined_call_operand.vmem [shape: bf16[64,32], index: 10, kind: input, shape index: {}]
  %s11 = inlined_call_operand.vmem [shape: f32[1,32], index: 11, kind: input, shape index: {}]
  %s12 = inlined_call_operand.vmem [shape: f32[1,32], index: 12, kind: input, shape index: {}]
  %s13 = inlined_call_operand.vmem [shape: f32[1,32], index: 13, kind: input, shape index: {}]
  %s14 = inlined_call_operand.hbm [shape: bf16[2,8,32], index: 14, kind: output, shape index: {}]
  %s15 = sld [smem:[#allocation0]]
  $region66: #{tpu_custom_call.1} parent=0
    _
  %s17 = ssub.s32 1, %s15
  %s18 = scalar_select 0, %s17, %s15
  $region1: #{tpu_custom_call.1} parent=0
    #allocation2 [shape = 'u8[4096]{0}', space=vmem, size = 0x1000, scoped, tag = 'output window, operand 0, single buffered']
    #allocation3 [shape = 's32[1]{0}', space=sflag, size = 0x4, scoped, tag = 'scoped memory for tpu_custom_call.1']
    %19 = vsyncpa [#allocation3], 0
    // Predicated region
    $region2: #{tpu_custom_call.1} parent=1 // pred_check
      _
    $region3: #{tpu_custom_call.1} parent=1 // pred_check_branch
      %21 = sbr.rel (0) target = $region5
    $region4: #{tpu_custom_call.1} parent=1 // pred_region
      _
    $region5: #{tpu_custom_call.1} parent=1 // pred_fallthru
      _
    // Predicated region
    $region6: #{tpu_custom_call.1} parent=1 // pred_check
      _
    $region7: #{tpu_custom_call.1} parent=1 // pred_check_branch
      %23 = sbr.rel (0) target = $region9
    $region8: #{tpu_custom_call.1} parent=1 // pred_region
      _
    $region9: #{tpu_custom_call.1} parent=1 // pred_fallthru
      _
    // Predicated region
    $region10: #{tpu_custom_call.1} parent=1 // pred_check
      _
    $region11: #{tpu_custom_call.1} parent=1 // pred_check_branch
      %25 = sbr.rel (0) target = $region13
    $region12: #{tpu_custom_call.1} parent=1 // pred_region
      _
    $region13: #{tpu_custom_call.1} parent=1 // pred_fallthru
      _
    // Predicated region
    $region14: #{tpu_custom_call.1} parent=1 // pred_check
      _
    $region15: #{tpu_custom_call.1} parent=1 // pred_check_branch
      %27 = sbr.rel (0) target = $region17
    $region16: #{tpu_custom_call.1} parent=1 // pred_region
      _
    $region17: #{tpu_custom_call.1} parent=1 // pred_fallthru
      _
    // Predicated region
    $region18: #{tpu_custom_call.1} parent=1 // pred_check
      _
    $region19: #{tpu_custom_call.1} parent=1 // pred_check_branch
      %29 = sbr.rel (0) target = $region21
    $region20: #{tpu_custom_call.1} parent=1 // pred_region
      _
    $region21: #{tpu_custom_call.1} parent=1 // pred_fallthru
      _
    // Predicated region
    $region22: #{tpu_custom_call.1} parent=1 // pred_check
      _
    $region23: #{tpu_custom_call.1} parent=1 // pred_check_branch
      %31 = sbr.rel (0) target = $region25
    $region24: #{tpu_custom_call.1} parent=1 // pred_region
      _
    $region25: #{tpu_custom_call.1} parent=1 // pred_fallthru
      _
    // Predicated region
    $region26: #{tpu_custom_call.1} parent=1 // pred_check
      _
    $region27: #{tpu_custom_call.1} parent=1 // pred_check_branch
      %33 = sbr.rel (0) target = $region29
    $region28: #{tpu_custom_call.1} parent=1 // pred_region
      _
    $region29: #{tpu_custom_call.1} parent=1 // pred_fallthru
      _
    // Predicated region
    $region30: #{tpu_custom_call.1} parent=1 // pred_check
      _
    $region31: #{tpu_custom_call.1} parent=1 // pred_check_branch
      %35 = sbr.rel (0) target = $region33
    $region32: #{tpu_custom_call.1} parent=1 // pred_region
      _
    $region33: #{tpu_custom_call.1} parent=1 // pred_fallthru
      _
    // Predicated region
    $region34: #{tpu_custom_call.1} parent=1 // pred_check
      _
    $region35: #{tpu_custom_call.1} parent=1 // pred_check_branch
      %37 = sbr.rel (0) target = $region37
    $region36: #{tpu_custom_call.1} parent=1 // pred_region
      _
    $region37: #{tpu_custom_call.1} parent=1 // pred_fallthru
      _
    // Predicated region
    $region38: #{tpu_custom_call.1} parent=1 // pred_check
      _
    $region39: #{tpu_custom_call.1} parent=1 // pred_check_branch
      %39 = sbr.rel (0) target = $region41
    $region40: #{tpu_custom_call.1} parent=1 // pred_region
      _
    $region41: #{tpu_custom_call.1} parent=1 // pred_fallthru
      _
    // Predicated region
    $region42: #{tpu_custom_call.1} parent=1 // pred_check
      _
    $region43: #{tpu_custom_call.1} parent=1 // pred_check_branch
      %41 = sbr.rel (0) target = $region45
    $region44: #{tpu_custom_call.1} parent=1 // pred_region
      _
    $region45: #{tpu_custom_call.1} parent=1 // pred_fallthru
      _
    // Predicated region
    $region46: #{tpu_custom_call.1} parent=1 // pred_check
      _
    $region47: #{tpu_custom_call.1} parent=1 // pred_check_branch
      %43 = sbr.rel (0) target = $region49
    $region48: #{tpu_custom_call.1} parent=1 // pred_region
      _
    $region49: #{tpu_custom_call.1} parent=1 // pred_fallthru
      _
    // Predicated region
    $region50: #{tpu_custom_call.1} parent=1 // pred_check
      _
    $region51: #{tpu_custom_call.1} parent=1 // pred_check_branch
      %45 = sbr.rel (0) target = $region53
    $region52: #{tpu_custom_call.1} parent=1 // pred_region
      _
    $region53: #{tpu_custom_call.1} parent=1 // pred_fallthru
      _
    // Predicated region
    $region54: #{tpu_custom_call.1} parent=1 // pred_check
      _
    $region55: #{tpu_custom_call.1} parent=1 // pred_check_branch
      %47 = sbr.rel (0) target = $region57
    $region56: #{tpu_custom_call.1} parent=1 // pred_region
      _
    $region57: #{tpu_custom_call.1} parent=1 // pred_fallthru
      _
    %v49 = vld [vmem:[%s0] sm:$0xf]
    %v50 = vld [vmem:[%s0 + $0x4] sm:$0xf]
    %v51 = vunpack.c.l.bf16 %v49
    %v52 = vunpack.c.l.bf16 %v50
    %55 = vrot.lane.b32.xlu0 %v49, 120
    %v56 = vpop.permute.xlu0 %55
    %57 = vrot.lane.b32.xlu0 %v50, 120
    %v58 = vpop.permute.xlu0 %57
    %59 = vrot.lane.b32.xlu0 %v49, 112
    %v60 = vpop.permute.xlu0 %59
    %61 = vrot.lane.b32.xlu0 %v50, 112
    %v62 = vpop.permute.xlu0 %61
    %63 = vrot.lane.b32.xlu0 %v49, 104
    %v64 = vpop.permute.xlu0 %63
    %65 = vrot.lane.b32.xlu0 %v50, 104
    %v66 = vpop.permute.xlu0 %65
    %v69 = vpack.i.b16 %v56, %v49
    %v70 = vshrl.u32 %v49, 16
    %v71 = vshrl.u32 %v56, 16
    %v72 = vpack.i.b16 %v71, %v70
    %v75 = vpack.i.b16 %v64, %v60
    %v76 = vshrl.u32 %v60, 16
    %v77 = vshrl.u32 %v64, 16
    %v78 = vpack.i.b16 %v77, %v76
    %v81 = vpack.i.b16 %v58, %v50
    %v82 = vshrl.u32 %v50, 16
    %v83 = vshrl.u32 %v58, 16
    %v84 = vpack.i.b16 %v83, %v82
    %v87 = vpack.i.b16 %v66, %v62
    %v88 = vshrl.u32 %v62, 16
    %v89 = vshrl.u32 %v66, 16
    %v90 = vpack.i.b16 %v89, %v88
    %v93 = vunpack.c.l.s4 1983009808
    %v94 = vunpack.c.0.s8 %v93
    %v95 = vlaneseq
    %v96 = vshrl.u32 %v95, 7
    %v97 = vsub.s32 %v94, %v96
    %v98 = vrot.slane %v69, %v97
    %v101 = vunpack.c.l.s4 1983009808
    %v102 = vunpack.c.0.s8 %v101
    %v103 = vlaneseq
    %v104 = vshrl.u32 %v103, 7
    %v105 = vsub.s32 %v102, %v104
    %v106 = vrot.slane %v75, %v105
    %v107 = vcombine.low %v98, %v106
    %v108 = vcombine.high %v98, %v106
    %v110 = vunpack.c.l.s4 1934713408
    %v111 = vunpack.c.0.s8 %v110
    %v112 = vlaneseq
    %v113 = vshrl.u32 %v112, 7
    %v114 = vsub.s32 %v111, %v113
    %v115 = vrot.slane %v107, %v114
    %v117 = vunpack.c.l.s4 1934713408
    %v118 = vunpack.c.0.s8 %v117
    %v119 = vlaneseq
    %v120 = vshrl.u32 %v119, 7
    %v121 = vsub.s32 %v118, %v120
    %v122 = vrot.slane %v108, %v121
    %v123 = vcombine.high %v115, 0
    %v124 = vcombine.high %v122, 0
    %v127 = vunpack.c.l.s4 1983009808
    %v128 = vunpack.c.0.s8 %v127
    %v129 = vlaneseq
    %v130 = vshrl.u32 %v129, 7
    %v131 = vsub.s32 %v128, %v130
    %v132 = vrot.slane %v72, %v131
    %v135 = vunpack.c.l.s4 1983009808
    %v136 = vunpack.c.0.s8 %v135
    %v137 = vlaneseq
    %v138 = vshrl.u32 %v137, 7
    %v139 = vsub.s32 %v136, %v138
    %v140 = vrot.slane %v78, %v139
    %v141 = vcombine.low %v132, %v140
    %v142 = vcombine.high %v132, %v140
    %v144 = vunpack.c.l.s4 1934713408
    %v145 = vunpack.c.0.s8 %v144
    %v146 = vlaneseq
    %v147 = vshrl.u32 %v146, 7
    %v148 = vsub.s32 %v145, %v147
    %v149 = vrot.slane %v141, %v148
    %v151 = vunpack.c.l.s4 1934713408
    %v152 = vunpack.c.0.s8 %v151
    %v153 = vlaneseq
    %v154 = vshrl.u32 %v153, 7
    %v155 = vsub.s32 %v152, %v154
    %v156 = vrot.slane %v142, %v155
    %v157 = vcombine.high %v149, 0
    %v158 = vcombine.high %v156, 0
    %v161 = vunpack.c.l.s4 1983009808
    %v162 = vunpack.c.0.s8 %v161
    %v163 = vlaneseq
    %v164 = vshrl.u32 %v163, 7
    %v165 = vsub.s32 %v162, %v164
    %v166 = vrot.slane %v81, %v165
    %v169 = vunpack.c.l.s4 1983009808
    %v170 = vunpack.c.0.s8 %v169
    %v171 = vlaneseq
    %v172 = vshrl.u32 %v171, 7
    %v173 = vsub.s32 %v170, %v172
    %v174 = vrot.slane %v87, %v173
    %v175 = vcombine.low %v166, %v174
    %v176 = vcombine.high %v166, %v174
    %v178 = vunpack.c.l.s4 1934713408
    %v179 = vunpack.c.0.s8 %v178
    %v180 = vlaneseq
    %v181 = vshrl.u32 %v180, 7
    %v182 = vsub.s32 %v179, %v181
    %v183 = vrot.slane %v175, %v182
    %v185 = vunpack.c.l.s4 1934713408
    %v186 = vunpack.c.0.s8 %v185
    %v187 = vlaneseq
    %v188 = vshrl.u32 %v187, 7
    %v189 = vsub.s32 %v186, %v188
    %v190 = vrot.slane %v176, %v189
    %v191 = vcombine.high %v183, 0
    %v192 = vcombine.high %v190, 0
    %v195 = vunpack.c.l.s4 1983009808
    %v196 = vunpack.c.0.s8 %v195
    %v197 = vlaneseq
    %v198 = vshrl.u32 %v197, 7
    %v199 = vsub.s32 %v196, %v198
    %v200 = vrot.slane %v84, %v199
    %v203 = vunpack.c.l.s4 1983009808
    %v204 = vunpack.c.0.s8 %v203
    %v205 = vlaneseq
    %v206 = vshrl.u32 %v205, 7
    %v207 = vsub.s32 %v204, %v206
    %v208 = vrot.slane %v90, %v207
    %v209 = vcombine.low %v200, %v208
    %v210 = vcombine.high %v200, %v208
    %v212 = vunpack.c.l.s4 1934713408
    %v213 = vunpack.c.0.s8 %v212
    %v214 = vlaneseq
    %v215 = vshrl.u32 %v214, 7
    %v216 = vsub.s32 %v213, %v215
    %v217 = vrot.slane %v209, %v216
    %v219 = vunpack.c.l.s4 1934713408
    %v220 = vunpack.c.0.s8 %v219
    %v221 = vlaneseq
    %v222 = vshrl.u32 %v221, 7
    %v223 = vsub.s32 %v220, %v222
    %v224 = vrot.slane %v210, %v223
    %v225 = vcombine.high %v217, 0
    %v226 = vcombine.high %v224, 0
    %v227 = vcombine.low %v115, %v122
    %v229 = vunpack.c.l.s4 1983009808
    %v230 = vunpack.c.0.s8 %v229
    %v231 = vlaneseq
    %v232 = vshrl.u32 %v231, 7
    %v233 = vsub.s32 %v230, %v232
    %v234 = vrot.slane %v227, %v233
    %v235 = vcombine.low %v123, %v124
    %v237 = vunpack.c.l.s4 1983009808
    %v238 = vunpack.c.0.s8 %v237
    %v239 = vlaneseq
    %v240 = vshrl.u32 %v239, 7
    %v241 = vsub.s32 %v238, %v240
    %v242 = vrot.slane %v235, %v241
    %v243 = vcombine.low %v234, %v242
    %v245 = vunpack.c.l.s4 1934713408
    %v246 = vunpack.c.0.s8 %v245
    %v247 = vlaneseq
    %v248 = vshrl.u32 %v247, 7
    %v249 = vsub.s32 %v246, %v248
    %v250 = vrot.slane %v243, %v249
    %v251 = vcombine.high %v250, 0
    %v252 = vcombine.low %v149, %v156
    %v254 = vunpack.c.l.s4 1983009808
    %v255 = vunpack.c.0.s8 %v254
    %v256 = vlaneseq
    %v257 = vshrl.u32 %v256, 7
    %v258 = vsub.s32 %v255, %v257
    %v259 = vrot.slane %v252, %v258
    %v260 = vcombine.low %v157, %v158
    %v262 = vunpack.c.l.s4 1983009808
    %v263 = vunpack.c.0.s8 %v262
    %v264 = vlaneseq
    %v265 = vshrl.u32 %v264, 7
    %v266 = vsub.s32 %v263, %v265
    %v267 = vrot.slane %v260, %v266
    %v268 = vcombine.low %v259, %v267
    %v270 = vunpack.c.l.s4 1934713408
    %v271 = vunpack.c.0.s8 %v270
    %v272 = vlaneseq
    %v273 = vshrl.u32 %v272, 7
    %v274 = vsub.s32 %v271, %v273
    %v275 = vrot.slane %v268, %v274
    %v276 = vcombine.high %v275, 0
    %v277 = vcombine.low %v183, %v190
    %v279 = vunpack.c.l.s4 1983009808
    %v280 = vunpack.c.0.s8 %v279
    %v281 = vlaneseq
    %v282 = vshrl.u32 %v281, 7
    %v283 = vsub.s32 %v280, %v282
    %v284 = vrot.slane %v277, %v283
    %v285 = vcombine.low %v191, %v192
    %v287 = vunpack.c.l.s4 1983009808
    %v288 = vunpack.c.0.s8 %v287
    %v289 = vlaneseq
    %v290 = vshrl.u32 %v289, 7
    %v291 = vsub.s32 %v288, %v290
    %v292 = vrot.slane %v285, %v291
    %v293 = vcombine.low %v284, %v292
    %v295 = vunpack.c.l.s4 1934713408
    %v296 = vunpack.c.0.s8 %v295
    %v297 = vlaneseq
    %v298 = vshrl.u32 %v297, 7
    %v299 = vsub.s32 %v296, %v298
    %v300 = vrot.slane %v293, %v299
    %v301 = vcombine.high %v300, 0
    %v302 = vcombine.low %v217, %v224
    %v304 = vunpack.c.l.s4 1983009808
    %v305 = vunpack.c.0.s8 %v304
    %v306 = vlaneseq
    %v307 = vshrl.u32 %v306, 7
    %v308 = vsub.s32 %v305, %v307
    %v309 = vrot.slane %v302, %v308
    %v310 = vcombine.low %v225, %v226
    %v312 = vunpack.c.l.s4 1983009808
    %v313 = vunpack.c.0.s8 %v312
    %v314 = vlaneseq
    %v315 = vshrl.u32 %v314, 7
    %v316 = vsub.s32 %v313, %v315
    %v317 = vrot.slane %v310, %v316
    %v318 = vcombine.low %v309, %v317
    %v320 = vunpack.c.l.s4 1934713408
    %v321 = vunpack.c.0.s8 %v320
    %v322 = vlaneseq
    %v323 = vshrl.u32 %v322, 7
    %v324 = vsub.s32 %v321, %v323
    %v325 = vrot.slane %v318, %v324
    %v326 = vcombine.high %v325, 0
    %v329 = vpack.i.b16 %v275, %v250
    %v330 = vshrl.u32 %v250, 16
    %v331 = vshrl.u32 %v275, 16
    %v332 = vpack.i.b16 %v331, %v330
    %v335 = vpack.i.b16 %v276, %v251
    %v336 = vshrl.u32 %v251, 16
    %v337 = vshrl.u32 %v276, 16
    %v338 = vpack.i.b16 %v337, %v336
    %v341 = vpack.i.b16 %v325, %v300
    %v342 = vshrl.u32 %v300, 16
    %v343 = vshrl.u32 %v325, 16
    %v344 = vpack.i.b16 %v343, %v342
    %v347 = vpack.i.b16 %v326, %v301
    %v348 = vshrl.u32 %v301, 16
    %v349 = vshrl.u32 %v326, 16
    %v350 = vpack.i.b16 %v349, %v348
    %v351 = vld [vmem:[%s1] sm:$0xf]
    %v352 = vunpack.c.l.b16 %v329
    %v353 = vunpack.c.l.b16 %v341
    %v354 = vunpack.c.l.b16 %v332
    %v355 = vunpack.c.l.b16 %v344
    %v356 = vunpack.c.l.b16 %v335
    %v357 = vunpack.c.l.b16 %v347
    %v358 = vunpack.c.l.b16 %v338
    %v359 = vunpack.c.l.b16 %v350
    %v360 = vpack.c.b16 %v353, %v352
    %v361 = vpack.c.b16 %v355, %v354
    %v362 = vpack.c.b16 %v357, %v356
    %v363 = vpack.c.b16 %v359, %v358
    %vm364 = vcmask 64512
    %v366 = vsel %vm364, %v360, 0
    %v369 = vsel %vm364, %v361, 0
    %v372 = vsel %vm364, %v362, 0
    %v375 = vsel %vm364, %v363, 0
    %vm377 = vcmask 1043456
    %v379 = vsel %vm377, %v351, 0
    %381 = vmatprep.subr.bf16.mxu0 0
    %382 = vmatpush1.bf16.msra.mxu0 %v379
    %383 = vmatprep.subr.bf16.mxu0 0
    %384 = vmatpush1.bf16.msra.mxu0 0
    %385 = vmatprep.subr.bf16.mxu0 0
    %386 = vmatpush1.bf16.msra.mxu0 0
    %387 = vmatprep.subr.bf16.mxu0 0
    %388 = vmatpush1.bf16.msra.mxu0 0
    %389 = vmatprep.subr.bf16.mxu0 0
    %390 = vmatpush1.bf16.msra.mxu0 0
    %391 = vmatprep.subr.bf16.mxu0 0
    %392 = vmatpush1.bf16.msra.mxu0 0
    %393 = vmatprep.subr.bf16.mxu0 0
    %394 = vmatpush1.bf16.msra.mxu0 0
    %395 = vmatprep.subr.bf16.mxu0 0
    %396 = vmatpush1.bf16.msra.mxu0 0
    %397 = vmatprep.subr.bf16.mxu0 0
    %398 = vmatpush1.bf16.msra.mxu0 0
    %399 = vmatprep.subr.bf16.mxu0 0
    %400 = vmatpush1.bf16.msra.mxu0 0
    %401 = vmatprep.subr.bf16.mxu0 0
    %402 = vmatpush1.bf16.msra.mxu0 0
    %403 = vmatprep.subr.bf16.mxu0 0
    %404 = vmatpush1.bf16.msra.mxu0 0
    %405 = vmatprep.subr.bf16.mxu0 0
    %406 = vmatpush1.bf16.msra.mxu0 0
    %407 = vmatprep.subr.bf16.mxu0 0
    %408 = vmatpush1.bf16.msra.mxu0 0
    %409 = vmatprep.subr.bf16.mxu0 0
    %410 = vmatpush1.bf16.msra.mxu0 0
    %411 = vmatprep.subr.bf16.mxu0 0
    %412 = vmatpush1.bf16.msra.mxu0 0
    %413 = vmatprep.mubr.bf16.mxu0 0
    %414 = vmatmul.mubr.bf16.gmra.mrb[0].mxu0 %v366
    %v415 = vpop.f32.mrb[0].mxu0
    %v416 = vadd.f32 0.0, %v415
    %v417 = vpop.f32.mrb[0].mxu0
    %v418 = vpop.f32.mrb[0].mxu0
    %v419 = vadd.f32 0.0, %v418
    %v420 = vpop.f32.mrb[0].mxu0
    %421 = vmatprep.mubr.bf16.mxu0 0
    %422 = vmatmul.mubr.bf16.gmra.mrb[0].mxu0 %v369
    %v423 = vpop.f32.mrb[0].mxu0
    %v424 = vadd.f32 0.0, %v423
    %v425 = vpop.f32.mrb[0].mxu0
    %v426 = vpop.f32.mrb[0].mxu0
    %v427 = vadd.f32 0.0, %v426
    %v428 = vpop.f32.mrb[0].mxu0
    %429 = vmatprep.mubr.bf16.mxu0 0
    %430 = vmatmul.mubr.bf16.gmra.mrb[0].mxu0 %v372
    %v431 = vpop.f32.mrb[0].mxu0
    %v432 = vadd.f32 0.0, %v431
    %v433 = vpop.f32.mrb[0].mxu0
    %v434 = vpop.f32.mrb[0].mxu0
    %v435 = vadd.f32 0.0, %v434
    %v436 = vpop.f32.mrb[0].mxu0
    %437 = vmatprep.mubr.bf16.mxu0 0
    %438 = vmatmul.mubr.bf16.gmra.mrb[0].mxu0 %v375
    %v439 = vpop.f32.mrb[0].mxu0
    %v440 = vadd.f32 0.0, %v439
    %v441 = vpop.f32.mrb[0].mxu0
    %v442 = vpop.f32.mrb[0].mxu0
    %v443 = vadd.f32 0.0, %v442
    %v444 = vpop.f32.mrb[0].mxu0
    %445 = vdwg.mxu0
    %v446 = vld [vmem:[%s2] sm:$0xf]
    %v448 = vsel %vm377, %v446, 0
    %450 = vmatprep.subr.bf16.mxu0 0
    %451 = vmatpush1.bf16.msra.mxu0 %v448
    %452 = vmatprep.subr.bf16.mxu0 0
    %453 = vmatpush1.bf16.msra.mxu0 0
    %454 = vmatprep.subr.bf16.mxu0 0
    %455 = vmatpush1.bf16.msra.mxu0 0
    %456 = vmatprep.subr.bf16.mxu0 0
    %457 = vmatpush1.bf16.msra.mxu0 0
    %458 = vmatprep.subr.bf16.mxu0 0
    %459 = vmatpush1.bf16.msra.mxu0 0
    %460 = vmatprep.subr.bf16.mxu0 0
    %461 = vmatpush1.bf16.msra.mxu0 0
    %462 = vmatprep.subr.bf16.mxu0 0
    %463 = vmatpush1.bf16.msra.mxu0 0
    %464 = vmatprep.subr.bf16.mxu0 0
    %465 = vmatpush1.bf16.msra.mxu0 0
    %466 = vmatprep.subr.bf16.mxu0 0
    %467 = vmatpush1.bf16.msra.mxu0 0
    %468 = vmatprep.subr.bf16.mxu0 0
    %469 = vmatpush1.bf16.msra.mxu0 0
    %470 = vmatprep.subr.bf16.mxu0 0
    %471 = vmatpush1.bf16.msra.mxu0 0
    %472 = vmatprep.subr.bf16.mxu0 0
    %473 = vmatpush1.bf16.msra.mxu0 0
    %474 = vmatprep.subr.bf16.mxu0 0
    %475 = vmatpush1.bf16.msra.mxu0 0
    %476 = vmatprep.subr.bf16.mxu0 0
    %477 = vmatpush1.bf16.msra.mxu0 0
    %478 = vmatprep.subr.bf16.mxu0 0
    %479 = vmatpush1.bf16.msra.mxu0 0
    %480 = vmatprep.subr.bf16.mxu0 0
    %481 = vmatpush1.bf16.msra.mxu0 0
    %482 = vmatprep.mubr.bf16.mxu0 0
    %483 = vmatmul.mubr.bf16.gmra.mrb[0].mxu0 %v366
    %v484 = vpop.f32.mrb[0].mxu0
    %v485 = vadd.f32 0.0, %v484
    %v486 = vpop.f32.mrb[0].mxu0
    %v487 = vpop.f32.mrb[0].mxu0
    %v488 = vadd.f32 0.0, %v487
    %v489 = vpop.f32.mrb[0].mxu0
    %490 = vmatprep.mubr.bf16.mxu0 0
    %491 = vmatmul.mubr.bf16.gmra.mrb[0].mxu0 %v369
    %v492 = vpop.f32.mrb[0].mxu0
    %v493 = vadd.f32 0.0, %v492
    %v494 = vpop.f32.mrb[0].mxu0
    %v495 = vpop.f32.mrb[0].mxu0
    %v496 = vadd.f32 0.0, %v495
    %v497 = vpop.f32.mrb[0].mxu0
    %498 = vmatprep.mubr.bf16.mxu0 0
    %499 = vmatmul.mubr.bf16.gmra.mrb[0].mxu0 %v372
    %v500 = vpop.f32.mrb[0].mxu0
    %v501 = vadd.f32 0.0, %v500
    %v502 = vpop.f32.mrb[0].mxu0
    %v503 = vpop.f32.mrb[0].mxu0
    %v504 = vadd.f32 0.0, %v503
    %v505 = vpop.f32.mrb[0].mxu0
    %506 = vmatprep.mubr.bf16.mxu0 0
    %507 = vmatmul.mubr.bf16.gmra.mrb[0].mxu0 %v375
    %v508 = vpop.f32.mrb[0].mxu0
    %v509 = vadd.f32 0.0, %v508
    %v510 = vpop.f32.mrb[0].mxu0
    %v511 = vpop.f32.mrb[0].mxu0
    %v512 = vadd.f32 0.0, %v511
    %v513 = vpop.f32.mrb[0].mxu0
    %514 = vdwg.mxu0
    %v515 = vld [vmem:[%s3] sm:$0xf]
    %v517 = vsel %vm377, %v515, 0
    %519 = vmatprep.subr.bf16.mxu0 0
    %520 = vmatpush1.bf16.msra.mxu0 %v517
    %521 = vmatprep.subr.bf16.mxu0 0
    %522 = vmatpush1.bf16.msra.mxu0 0
    %523 = vmatprep.subr.bf16.mxu0 0
    %524 = vmatpush1.bf16.msra.mxu0 0
    %525 = vmatprep.subr.bf16.mxu0 0
    %526 = vmatpush1.bf16.msra.mxu0 0
    %527 = vmatprep.subr.bf16.mxu0 0
    %528 = vmatpush1.bf16.msra.mxu0 0
    %529 = vmatprep.subr.bf16.mxu0 0
    %530 = vmatpush1.bf16.msra.mxu0 0
    %531 = vmatprep.subr.bf16.mxu0 0
    %532 = vmatpush1.bf16.msra.mxu0 0
    %533 = vmatprep.subr.bf16.mxu0 0
    %534 = vmatpush1.bf16.msra.mxu0 0
    %535 = vmatprep.subr.bf16.mxu0 0
    %536 = vmatpush1.bf16.msra.mxu0 0
    %537 = vmatprep.subr.bf16.mxu0 0
    %538 = vmatpush1.bf16.msra.mxu0 0
    %539 = vmatprep.subr.bf16.mxu0 0
    %540 = vmatpush1.bf16.msra.mxu0 0
    %541 = vmatprep.subr.bf16.mxu0 0
    %542 = vmatpush1.bf16.msra.mxu0 0
    %543 = vmatprep.subr.bf16.mxu0 0
    %544 = vmatpush1.bf16.msra.mxu0 0
    %545 = vmatprep.subr.bf16.mxu0 0
    %546 = vmatpush1.bf16.msra.mxu0 0
    %547 = vmatprep.subr.bf16.mxu0 0
    %548 = vmatpush1.bf16.msra.mxu0 0
    %549 = vmatprep.subr.bf16.mxu0 0
    %550 = vmatpush1.bf16.msra.mxu0 0
    %551 = vmatprep.mubr.bf16.mxu0 0
    %552 = vmatmul.mubr.bf16.gmra.mrb[0].mxu0 %v366
    %v553 = vpop.f32.mrb[0].mxu0
    %v554 = vadd.f32 0.0, %v553
    %v555 = vpop.f32.mrb[0].mxu0
    %v556 = vpop.f32.mrb[0].mxu0
    %v557 = vadd.f32 0.0, %v556
    %v558 = vpop.f32.mrb[0].mxu0
    %559 = vmatprep.mubr.bf16.mxu0 0
    %560 = vmatmul.mubr.bf16.gmra.mrb[0].mxu0 %v369
    %v561 = vpop.f32.mrb[0].mxu0
    %v562 = vadd.f32 0.0, %v561
    %v563 = vpop.f32.mrb[0].mxu0
    %v564 = vpop.f32.mrb[0].mxu0
    %v565 = vadd.f32 0.0, %v564
    %v566 = vpop.f32.mrb[0].mxu0
    %567 = vmatprep.mubr.bf16.mxu0 0
    %568 = vmatmul.mubr.bf16.gmra.mrb[0].mxu0 %v372
    %v569 = vpop.f32.mrb[0].mxu0
    %v570 = vadd.f32 0.0, %v569
    %v571 = vpop.f32.mrb[0].mxu0
    %v572 = vpop.f32.mrb[0].mxu0
    %v573 = vadd.f32 0.0, %v572
    %v574 = vpop.f32.mrb[0].mxu0
    %575 = vmatprep.mubr.bf16.mxu0 0
    %576 = vmatmul.mubr.bf16.gmra.mrb[0].mxu0 %v375
    %v577 = vpop.f32.mrb[0].mxu0
    %v578 = vadd.f32 0.0, %v577
    %v579 = vpop.f32.mrb[0].mxu0
    %v580 = vpop.f32.mrb[0].mxu0
    %v581 = vadd.f32 0.0, %v580
    %v582 = vpop.f32.mrb[0].mxu0
    %583 = vdwg.mxu0
    %v584 = vmul.f32 %v416, 0.17677669
    %v585 = vmul.f32 %v419, 0.17677669
    %v586 = vmul.f32 %v424, 0.17677669
    %v587 = vmul.f32 %v427, 0.17677669
    %v588 = vmul.f32 %v432, 0.17677669
    %v589 = vmul.f32 %v435, 0.17677669
    %v590 = vmul.f32 %v440, 0.17677669
    %v591 = vmul.f32 %v443, 0.17677669
    %v592 = vpack.c.bf16 %v585, %v584
    %v593 = vpack.c.bf16 %v587, %v586
    %v594 = vpack.c.bf16 %v589, %v588
    %v595 = vpack.c.bf16 %v591, %v590
    %v600 = vunpack.c.l.b16 %v592
    %v601 = vunpack.c.h.b16 %v592
    %v602 = vunpack.c.l.b16 %v593
    %v603 = vunpack.c.h.b16 %v593
    %v604 = vunpack.c.l.b16 %v594
    %v605 = vunpack.c.h.b16 %v594
    %v606 = vunpack.c.l.b16 %v595
    %v607 = vunpack.c.h.b16 %v595
    %v608 = vpack.c.b16 %v600, %v600
    %v609 = vpack.c.b16 %v601, %v601
    %v610 = vpack.c.b16 %v602, %v602
    %v611 = vpack.c.b16 %v603, %v603
    %v612 = vpack.c.b16 %v604, %v604
    %v613 = vpack.c.b16 %v605, %v605
    %v614 = vpack.c.b16 %v606, %v606
    %v615 = vpack.c.b16 %v607, %v607
    %v616 = vpack.c.bf16 %v488, %v485
    %v617 = vpack.c.bf16 %v496, %v493
    %v618 = vpack.c.bf16 %v504, %v501
    %v619 = vpack.c.bf16 %v512, %v509
    %v624 = vunpack.c.l.b16 %v616
    %v625 = vunpack.c.h.b16 %v616
    %v626 = vunpack.c.l.b16 %v617
    %v627 = vunpack.c.h.b16 %v617
    %v628 = vunpack.c.l.b16 %v618
    %v629 = vunpack.c.h.b16 %v618
    %v630 = vunpack.c.l.b16 %v619
    %v631 = vunpack.c.h.b16 %v619
    %v632 = vpack.c.b16 %v624, %v624
    %v633 = vpack.c.b16 %v625, %v625
    %v634 = vpack.c.b16 %v626, %v626
    %v635 = vpack.c.b16 %v627, %v627
    %v636 = vpack.c.b16 %v628, %v628
    %v637 = vpack.c.b16 %v629, %v629
    %v638 = vpack.c.b16 %v630, %v630
    %v639 = vpack.c.b16 %v631, %v631
    %v640 = vpack.c.bf16 %v557, %v554
    %v641 = vpack.c.bf16 %v565, %v562
    %v642 = vpack.c.bf16 %v573, %v570
    %v643 = vpack.c.bf16 %v581, %v578
    %v648 = vunpack.c.l.b16 %v640
    %v649 = vunpack.c.h.b16 %v640
    %v650 = vunpack.c.l.b16 %v641
    %v651 = vunpack.c.h.b16 %v641
    %v652 = vunpack.c.l.b16 %v642
    %v653 = vunpack.c.h.b16 %v642
    %v654 = vunpack.c.l.b16 %v643
    %v655 = vunpack.c.h.b16 %v643
    %v656 = vpack.c.b16 %v648, %v648
    %v657 = vpack.c.b16 %v649, %v649
    %v658 = vpack.c.b16 %v650, %v650
    %v659 = vpack.c.b16 %v651, %v651
    %v660 = vpack.c.b16 %v652, %v652
    %v661 = vpack.c.b16 %v653, %v653
    %v662 = vpack.c.b16 %v654, %v654
    %v663 = vpack.c.b16 %v655, %v655
    %v665 = vsel %vm364, %v608, 0
    %v668 = vsel %vm364, %v632, 0
    %670 = vmatprep.subr.bf16.mxu0 0
    %671 = vmatpush1.bf16.xpose.msra.mxu0 %v668
    %672 = vmatprep.subr.bf16.mxu0 0
    %673 = vmatpush1.bf16.xpose.msra.mxu0 0
    %674 = vmatprep.subr.bf16.mxu0 0
    %675 = vmatpush1.bf16.xpose.msra.mxu0 0
    %676 = vmatprep.subr.bf16.mxu0 0
    %677 = vmatpush1.bf16.xpose.msra.mxu0 0
    %678 = vmatprep.subr.bf16.mxu0 0
    %679 = vmatpush1.bf16.xpose.msra.mxu0 0
    %680 = vmatprep.subr.bf16.mxu0 0
    %681 = vmatpush1.bf16.xpose.msra.mxu0 0
    %682 = vmatprep.subr.bf16.mxu0 0
    %683 = vmatpush1.bf16.xpose.msra.mxu0 0
    %684 = vmatprep.subr.bf16.mxu0 0
    %685 = vmatpush1.bf16.xpose.msra.mxu0 0
    %686 = vmatprep.subr.bf16.mxu0 0
    %687 = vmatpush1.bf16.xpose.msra.mxu0 0
    %688 = vmatprep.subr.bf16.mxu0 0
    %689 = vmatpush1.bf16.xpose.msra.mxu0 0
    %690 = vmatprep.subr.bf16.mxu0 0
    %691 = vmatpush1.bf16.xpose.msra.mxu0 0
    %692 = vmatprep.subr.bf16.mxu0 0
    %693 = vmatpush1.bf16.xpose.msra.mxu0 0
    %694 = vmatprep.subr.bf16.mxu0 0
    %695 = vmatpush1.bf16.xpose.msra.mxu0 0
    %696 = vmatprep.subr.bf16.mxu0 0
    %697 = vmatpush1.bf16.xpose.msra.mxu0 0
    %698 = vmatprep.subr.bf16.mxu0 0
    %699 = vmatpush1.bf16.xpose.msra.mxu0 0
    %700 = vmatprep.subr.bf16.mxu0 0
    %701 = vmatpush1.bf16.xpose.msra.mxu0 0
    %702 = vmatprep.mubr.bf16.mxu0 0
    %703 = vmatmul.mubr.bf16.gmra.mrb[0].mxu0 %v665
    %v704 = vpop.f32.mrb[0].mxu0
    %v705 = vadd.f32 0.0, %v704
    %v706 = vpop.f32.mrb[0].mxu0
    %v707 = vpop.f32.mrb[0].mxu0
    %v708 = vpop.f32.mrb[0].mxu0
    %709 = vdwg.mxu0
    %v711 = vsel %vm364, %v609, 0
    %v714 = vsel %vm364, %v633, 0
    %716 = vmatprep.subr.bf16.mxu0 0
    %717 = vmatpush1.bf16.xpose.msra.mxu0 %v714
    %718 = vmatprep.subr.bf16.mxu0 0
    %719 = vmatpush1.bf16.xpose.msra.mxu0 0
    %720 = vmatprep.subr.bf16.mxu0 0
    %721 = vmatpush1.bf16.xpose.msra.mxu0 0
    %722 = vmatprep.subr.bf16.mxu0 0
    %723 = vmatpush1.bf16.xpose.msra.mxu0 0
    %724 = vmatprep.subr.bf16.mxu0 0
    %725 = vmatpush1.bf16.xpose.msra.mxu0 0
    %726 = vmatprep.subr.bf16.mxu0 0
    %727 = vmatpush1.bf16.xpose.msra.mxu0 0
    %728 = vmatprep.subr.bf16.mxu0 0
    %729 = vmatpush1.bf16.xpose.msra.mxu0 0
    %730 = vmatprep.subr.bf16.mxu0 0
    %731 = vmatpush1.bf16.xpose.msra.mxu0 0
    %732 = vmatprep.subr.bf16.mxu0 0
    %733 = vmatpush1.bf16.xpose.msra.mxu0 0
    %734 = vmatprep.subr.bf16.mxu0 0
    %735 = vmatpush1.bf16.xpose.msra.mxu0 0
    %736 = vmatprep.subr.bf16.mxu0 0
    %737 = vmatpush1.bf16.xpose.msra.mxu0 0
    %738 = vmatprep.subr.bf16.mxu0 0
    %739 = vmatpush1.bf16.xpose.msra.mxu0 0
    %740 = vmatprep.subr.bf16.mxu0 0
    %741 = vmatpush1.bf16.xpose.msra.mxu0 0
    %742 = vmatprep.subr.bf16.mxu0 0
    %743 = vmatpush1.bf16.xpose.msra.mxu0 0
    %744 = vmatprep.subr.bf16.mxu0 0
    %745 = vmatpush1.bf16.xpose.msra.mxu0 0
    %746 = vmatprep.subr.bf16.mxu0 0
    %747 = vmatpush1.bf16.xpose.msra.mxu0 0
    %748 = vmatprep.mubr.bf16.mxu0 0
    %749 = vmatmul.mubr.bf16.gmra.mrb[0].mxu0 %v711
    %v750 = vpop.f32.mrb[0].mxu0
    %v751 = vadd.f32 0.0, %v750
    %v752 = vpop.f32.mrb[0].mxu0
    %v753 = vpop.f32.mrb[0].mxu0
    %v754 = vpop.f32.mrb[0].mxu0
    %755 = vdwg.mxu0
    %v757 = vsel %vm364, %v610, 0
    %v760 = vsel %vm364, %v634, 0
    %762 = vmatprep.subr.bf16.mxu0 0
    %763 = vmatpush1.bf16.xpose.msra.mxu0 %v760
    %764 = vmatprep.subr.bf16.mxu0 0
    %765 = vmatpush1.bf16.xpose.msra.mxu0 0
    %766 = vmatprep.subr.bf16.mxu0 0
    %767 = vmatpush1.bf16.xpose.msra.mxu0 0
    %768 = vmatprep.subr.bf16.mxu0 0
    %769 = vmatpush1.bf16.xpose.msra.mxu0 0
    %770 = vmatprep.subr.bf16.mxu0 0
    %771 = vmatpush1.bf16.xpose.msra.mxu0 0
    %772 = vmatprep.subr.bf16.mxu0 0
    %773 = vmatpush1.bf16.xpose.msra.mxu0 0
    %774 = vmatprep.subr.bf16.mxu0 0
    %775 = vmatpush1.bf16.xpose.msra.mxu0 0
    %776 = vmatprep.subr.bf16.mxu0 0
    %777 = vmatpush1.bf16.xpose.msra.mxu0 0
    %778 = vmatprep.subr.bf16.mxu0 0
    %779 = vmatpush1.bf16.xpose.msra.mxu0 0
    %780 = vmatprep.subr.bf16.mxu0 0
    %781 = vmatpush1.bf16.xpose.msra.mxu0 0
    %782 = vmatprep.subr.bf16.mxu0 0
    %783 = vmatpush1.bf16.xpose.msra.mxu0 0
    %784 = vmatprep.subr.bf16.mxu0 0
    %785 = vmatpush1.bf16.xpose.msra.mxu0 0
    %786 = vmatprep.subr.bf16.mxu0 0
    %787 = vmatpush1.bf16.xpose.msra.mxu0 0
    %788 = vmatprep.subr.bf16.mxu0 0
    %789 = vmatpush1.bf16.xpose.msra.mxu0 0
    %790 = vmatprep.subr.bf16.mxu0 0
    %791 = vmatpush1.bf16.xpose.msra.mxu0 0
    %792 = vmatprep.subr.bf16.mxu0 0
    %793 = vmatpush1.bf16.xpose.msra.mxu0 0
    %794 = vmatprep.mubr.bf16.mxu0 0
    %795 = vmatmul.mubr.bf16.gmra.mrb[0].mxu0 %v757
    %v796 = vpop.f32.mrb[0].mxu0
    %v797 = vadd.f32 0.0, %v796
    %v798 = vpop.f32.mrb[0].mxu0
    %v799 = vpop.f32.mrb[0].mxu0
    %v800 = vpop.f32.mrb[0].mxu0
    %801 = vdwg.mxu0
    %v803 = vsel %vm364, %v611, 0
    %v806 = vsel %vm364, %v635, 0
    %808 = vmatprep.subr.bf16.mxu0 0
    %809 = vmatpush1.bf16.xpose.msra.mxu0 %v806
    %810 = vmatprep.subr.bf16.mxu0 0
    %811 = vmatpush1.bf16.xpose.msra.mxu0 0
    %812 = vmatprep.subr.bf16.mxu0 0
    %813 = vmatpush1.bf16.xpose.msra.mxu0 0
    %814 = vmatprep.subr.bf16.mxu0 0
    %815 = vmatpush1.bf16.xpose.msra.mxu0 0
    %816 = vmatprep.subr.bf16.mxu0 0
    %817 = vmatpush1.bf16.xpose.msra.mxu0 0
    %818 = vmatprep.subr.bf16.mxu0 0
    %819 = vmatpush1.bf16.xpose.msra.mxu0 0
    %820 = vmatprep.subr.bf16.mxu0 0
    %821 = vmatpush1.bf16.xpose.msra.mxu0 0
    %822 = vmatprep.subr.bf16.mxu0 0
    %823 = vmatpush1.bf16.xpose.msra.mxu0 0
    %824 = vmatprep.subr.bf16.mxu0 0
    %825 = vmatpush1.bf16.xpose.msra.mxu0 0
    %826 = vmatprep.subr.bf16.mxu0 0
    %827 = vmatpush1.bf16.xpose.msra.mxu0 0
    %828 = vmatprep.subr.bf16.mxu0 0
    %829 = vmatpush1.bf16.xpose.msra.mxu0 0
    %830 = vmatprep.subr.bf16.mxu0 0
    %831 = vmatpush1.bf16.xpose.msra.mxu0 0
    %832 = vmatprep.subr.bf16.mxu0 0
    %833 = vmatpush1.bf16.xpose.msra.mxu0 0
    %834 = vmatprep.subr.bf16.mxu0 0
    %835 = vmatpush1.bf16.xpose.msra.mxu0 0
    %836 = vmatprep.subr.bf16.mxu0 0
    %837 = vmatpush1.bf16.xpose.msra.mxu0 0
    %838 = vmatprep.subr.bf16.mxu0 0
    %839 = vmatpush1.bf16.xpose.msra.mxu0 0
    %840 = vmatprep.mubr.bf16.mxu0 0
    %841 = vmatmul.mubr.bf16.gmra.mrb[0].mxu0 %v803
    %v842 = vpop.f32.mrb[0].mxu0
    %v843 = vadd.f32 0.0, %v842
    %v844 = vpop.f32.mrb[0].mxu0
    %v845 = vpop.f32.mrb[0].mxu0
    %v846 = vpop.f32.mrb[0].mxu0
    %847 = vdwg.mxu0
    %v849 = vsel %vm364, %v612, 0
    %v852 = vsel %vm364, %v636, 0
    %854 = vmatprep.subr.bf16.mxu0 0
    %855 = vmatpush1.bf16.xpose.msra.mxu0 %v852
    %856 = vmatprep.subr.bf16.mxu0 0
    %857 = vmatpush1.bf16.xpose.msra.mxu0 0
    %858 = vmatprep.subr.bf16.mxu0 0
    %859 = vmatpush1.bf16.xpose.msra.mxu0 0
    %860 = vmatprep.subr.bf16.mxu0 0
    %861 = vmatpush1.bf16.xpose.msra.mxu0 0
    %862 = vmatprep.subr.bf16.mxu0 0
    %863 = vmatpush1.bf16.xpose.msra.mxu0 0
    %864 = vmatprep.subr.bf16.mxu0 0
    %865 = vmatpush1.bf16.xpose.msra.mxu0 0
    %866 = vmatprep.subr.bf16.mxu0 0
    %867 = vmatpush1.bf16.xpose.msra.mxu0 0
    %868 = vmatprep.subr.bf16.mxu0 0
    %869 = vmatpush1.bf16.xpose.msra.mxu0 0
    %870 = vmatprep.subr.bf16.mxu0 0
    %871 = vmatpush1.bf16.xpose.msra.mxu0 0
    %872 = vmatprep.subr.bf16.mxu0 0
    %873 = vmatpush1.bf16.xpose.msra.mxu0 0
    %874 = vmatprep.subr.bf16.mxu0 0
    %875 = vmatpush1.bf16.xpose.msra.mxu0 0
    %876 = vmatprep.subr.bf16.mxu0 0
    %877 = vmatpush1.bf16.xpose.msra.mxu0 0
    %878 = vmatprep.subr.bf16.mxu0 0
    %879 = vmatpush1.bf16.xpose.msra.mxu0 0
    %880 = vmatprep.subr.bf16.mxu0 0
    %881 = vmatpush1.bf16.xpose.msra.mxu0 0
    %882 = vmatprep.subr.bf16.mxu0 0
    %883 = vmatpush1.bf16.xpose.msra.mxu0 0
    %884 = vmatprep.subr.bf16.mxu0 0
    %885 = vmatpush1.bf16.xpose.msra.mxu0 0
    %886 = vmatprep.mubr.bf16.mxu0 0
    %887 = vmatmul.mubr.bf16.gmra.mrb[0].mxu0 %v849
    %v888 = vpop.f32.mrb[0].mxu0
    %v889 = vadd.f32 0.0, %v888
    %v890 = vpop.f32.mrb[0].mxu0
    %v891 = vpop.f32.mrb[0].mxu0
    %v892 = vpop.f32.mrb[0].mxu0
    %893 = vdwg.mxu0
    %v895 = vsel %vm364, %v613, 0
    %v898 = vsel %vm364, %v637, 0
    %900 = vmatprep.subr.bf16.mxu0 0
    %901 = vmatpush1.bf16.xpose.msra.mxu0 %v898
    %902 = vmatprep.subr.bf16.mxu0 0
    %903 = vmatpush1.bf16.xpose.msra.mxu0 0
    %904 = vmatprep.subr.bf16.mxu0 0
    %905 = vmatpush1.bf16.xpose.msra.mxu0 0
    %906 = vmatprep.subr.bf16.mxu0 0
    %907 = vmatpush1.bf16.xpose.msra.mxu0 0
    %908 = vmatprep.subr.bf16.mxu0 0
    %909 = vmatpush1.bf16.xpose.msra.mxu0 0
    %910 = vmatprep.subr.bf16.mxu0 0
    %911 = vmatpush1.bf16.xpose.msra.mxu0 0
    %912 = vmatprep.subr.bf16.mxu0 0
    %913 = vmatpush1.bf16.xpose.msra.mxu0 0
    %914 = vmatprep.subr.bf16.mxu0 0
    %915 = vmatpush1.bf16.xpose.msra.mxu0 0
    %916 = vmatprep.subr.bf16.mxu0 0
    %917 = vmatpush1.bf16.xpose.msra.mxu0 0
    %918 = vmatprep.subr.bf16.mxu0 0
    %919 = vmatpush1.bf16.xpose.msra.mxu0 0
    %920 = vmatprep.subr.bf16.mxu0 0
    %921 = vmatpush1.bf16.xpose.msra.mxu0 0
    %922 = vmatprep.subr.bf16.mxu0 0
    %923 = vmatpush1.bf16.xpose.msra.mxu0 0
    %924 = vmatprep.subr.bf16.mxu0 0
    %925 = vmatpush1.bf16.xpose.msra.mxu0 0
    %926 = vmatprep.subr.bf16.mxu0 0
    %927 = vmatpush1.bf16.xpose.msra.mxu0 0
    %928 = vmatprep.subr.bf16.mxu0 0
    %929 = vmatpush1.bf16.xpose.msra.mxu0 0
    %930 = vmatprep.subr.bf16.mxu0 0
    %931 = vmatpush1.bf16.xpose.msra.mxu0 0
    %932 = vmatprep.mubr.bf16.mxu0 0
    %933 = vmatmul.mubr.bf16.gmra.mrb[0].mxu0 %v895
    %v934 = vpop.f32.mrb[0].mxu0
    %v935 = vadd.f32 0.0, %v934
    %v936 = vpop.f32.mrb[0].mxu0
    %v937 = vpop.f32.mrb[0].mxu0
    %v938 = vpop.f32.mrb[0].mxu0
    %939 = vdwg.mxu0
    %v941 = vsel %vm364, %v614, 0
    %v944 = vsel %vm364, %v638, 0
    %946 = vmatprep.subr.bf16.mxu0 0
    %947 = vmatpush1.bf16.xpose.msra.mxu0 %v944
    %948 = vmatprep.subr.bf16.mxu0 0
    %949 = vmatpush1.bf16.xpose.msra.mxu0 0
    %950 = vmatprep.subr.bf16.mxu0 0
    %951 = vmatpush1.bf16.xpose.msra.mxu0 0
    %952 = vmatprep.subr.bf16.mxu0 0
    %953 = vmatpush1.bf16.xpose.msra.mxu0 0
    %954 = vmatprep.subr.bf16.mxu0 0
    %955 = vmatpush1.bf16.xpose.msra.mxu0 0
    %956 = vmatprep.subr.bf16.mxu0 0
    %957 = vmatpush1.bf16.xpose.msra.mxu0 0
    %958 = vmatprep.subr.bf16.mxu0 0
    %959 = vmatpush1.bf16.xpose.msra.mxu0 0
    %960 = vmatprep.subr.bf16.mxu0 0
    %961 = vmatpush1.bf16.xpose.msra.mxu0 0
    %962 = vmatprep.subr.bf16.mxu0 0
    %963 = vmatpush1.bf16.xpose.msra.mxu0 0
    %964 = vmatprep.subr.bf16.mxu0 0
    %965 = vmatpush1.bf16.xpose.msra.mxu0 0
    %966 = vmatprep.subr.bf16.mxu0 0
    %967 = vmatpush1.bf16.xpose.msra.mxu0 0
    %968 = vmatprep.subr.bf16.mxu0 0
    %969 = vmatpush1.bf16.xpose.msra.mxu0 0
    %970 = vmatprep.subr.bf16.mxu0 0
    %971 = vmatpush1.bf16.xpose.msra.mxu0 0
    %972 = vmatprep.subr.bf16.mxu0 0
    %973 = vmatpush1.bf16.xpose.msra.mxu0 0
    %974 = vmatprep.subr.bf16.mxu0 0
    %975 = vmatpush1.bf16.xpose.msra.mxu0 0
    %976 = vmatprep.subr.bf16.mxu0 0
    %977 = vmatpush1.bf16.xpose.msra.mxu0 0
    %978 = vmatprep.mubr.bf16.mxu0 0
    %979 = vmatmul.mubr.bf16.gmra.mrb[0].mxu0 %v941
    %v980 = vpop.f32.mrb[0].mxu0
    %v981 = vadd.f32 0.0, %v980
    %v982 = vpop.f32.mrb[0].mxu0
    %v983 = vpop.f32.mrb[0].mxu0
    %v984 = vpop.f32.mrb[0].mxu0
    %985 = vdwg.mxu0
    %v987 = vsel %vm364, %v615, 0
    %v990 = vsel %vm364, %v639, 0
    %992 = vmatprep.subr.bf16.mxu0 0
    %993 = vmatpush1.bf16.xpose.msra.mxu0 %v990
    %994 = vmatprep.subr.bf16.mxu0 0
    %995 = vmatpush1.bf16.xpose.msra.mxu0 0
    %996 = vmatprep.subr.bf16.mxu0 0
    %997 = vmatpush1.bf16.xpose.msra.mxu0 0
    %998 = vmatprep.subr.bf16.mxu0 0
    %999 = vmatpush1.bf16.xpose.msra.mxu0 0
    %1000 = vmatprep.subr.bf16.mxu0 0
    %1001 = vmatpush1.bf16.xpose.msra.mxu0 0
    %1002 = vmatprep.subr.bf16.mxu0 0
    %1003 = vmatpush1.bf16.xpose.msra.mxu0 0
    %1004 = vmatprep.subr.bf16.mxu0 0
    %1005 = vmatpush1.bf16.xpose.msra.mxu0 0
    %1006 = vmatprep.subr.bf16.mxu0 0
    %1007 = vmatpush1.bf16.xpose.msra.mxu0 0
    %1008 = vmatprep.subr.bf16.mxu0 0
    %1009 = vmatpush1.bf16.xpose.msra.mxu0 0
    %1010 = vmatprep.subr.bf16.mxu0 0
    %1011 = vmatpush1.bf16.xpose.msra.mxu0 0
    %1012 = vmatprep.subr.bf16.mxu0 0
    %1013 = vmatpush1.bf16.xpose.msra.mxu0 0
    %1014 = vmatprep.subr.bf16.mxu0 0
    %1015 = vmatpush1.bf16.xpose.msra.mxu0 0
    %1016 = vmatprep.subr.bf16.mxu0 0
    %1017 = vmatpush1.bf16.xpose.msra.mxu0 0
    %1018 = vmatprep.subr.bf16.mxu0 0
    %1019 = vmatpush1.bf16.xpose.msra.mxu0 0
    %1020 = vmatprep.subr.bf16.mxu0 0
    %1021 = vmatpush1.bf16.xpose.msra.mxu0 0
    %1022 = vmatprep.subr.bf16.mxu0 0
    %1023 = vmatpush1.bf16.xpose.msra.mxu0 0
    %1024 = vmatprep.mubr.bf16.mxu0 0
    %1025 = vmatmul.mubr.bf16.gmra.mrb[0].mxu0 %v987
    %v1026 = vpop.f32.mrb[0].mxu0
    %v1027 = vadd.f32 0.0, %v1026
    %v1028 = vpop.f32.mrb[0].mxu0
    %v1029 = vpop.f32.mrb[0].mxu0
    %v1030 = vpop.f32.mrb[0].mxu0
    %1031 = vdwg.mxu0
    %v1032 = vsel %vm364, %v705, -inf
    %1033 = vmax.xlane.f32.xlu0 %v1032
    %v1034 = vpop.xlane.xlu0 %1033
    %v1035 = vsel %vm364, %v751, -inf
    %1036 = vmax.xlane.f32.xlu0 %v1035
    %v1037 = vpop.xlane.xlu0 %1036
    %v1038 = vsel %vm364, %v797, -inf
    %1039 = vmax.xlane.f32.xlu0 %v1038
    %v1040 = vpop.xlane.xlu0 %1039
    %v1041 = vsel %vm364, %v843, -inf
    %1042 = vmax.xlane.f32.xlu0 %v1041
    %v1043 = vpop.xlane.xlu0 %1042
    %v1044 = vsel %vm364, %v889, -inf
    %1045 = vmax.xlane.f32.xlu0 %v1044
    %v1046 = vpop.xlane.xlu0 %1045
    %v1047 = vsel %vm364, %v935, -inf
    %1048 = vmax.xlane.f32.xlu0 %v1047
    %v1049 = vpop.xlane.xlu0 %1048
    %v1050 = vsel %vm364, %v981, -inf
    %1051 = vmax.xlane.f32.xlu0 %v1050
    %v1052 = vpop.xlane.xlu0 %1051
    %v1053 = vsel %vm364, %v1027, -inf
    %1054 = vmax.xlane.f32.xlu0 %v1053
    %v1055 = vpop.xlane.xlu0 %1054
    %v1056 = vsub.f32 %v705, %v1034
    %v1057 = vsub.f32 %v751, %v1037
    %v1058 = vsub.f32 %v797, %v1040
    %v1059 = vsub.f32 %v843, %v1043
    %v1060 = vsub.f32 %v889, %v1046
    %v1061 = vsub.f32 %v935, %v1049
    %v1062 = vsub.f32 %v981, %v1052
    %v1063 = vsub.f32 %v1027, %v1055
    %v1064 = vmul.f32 %v1056, 1.442695
    %v1065 = vpow.pop %v1064
    %v1066 = vmul.f32 %v1057, 1.442695
    %v1067 = vpow.pop %v1066
    %v1068 = vmul.f32 %v1058, 1.442695
    %v1069 = vpow.pop %v1068
    %v1070 = vmul.f32 %v1059, 1.442695
    %v1071 = vpow.pop %v1070
    %v1072 = vmul.f32 %v1060, 1.442695
    %v1073 = vpow.pop %v1072
    %v1074 = vmul.f32 %v1061, 1.442695
    %v1075 = vpow.pop %v1074
    %v1076 = vmul.f32 %v1062, 1.442695
    %v1077 = vpow.pop %v1076
    %v1078 = vmul.f32 %v1063, 1.442695
    %v1079 = vpow.pop %v1078
    %v1080 = vsel %vm364, %v1065, 0.0
    %1081 = vadd.xlane.f32.xlu0 %v1080
    %v1082 = vpop.xlane.xlu0 %1081
    %v1083 = vsel %vm364, %v1067, 0.0
    %1084 = vadd.xlane.f32.xlu0 %v1083
    %v1085 = vpop.xlane.xlu0 %1084
    %v1086 = vsel %vm364, %v1069, 0.0
    %1087 = vadd.xlane.f32.xlu0 %v1086
    %v1088 = vpop.xlane.xlu0 %1087
    %v1089 = vsel %vm364, %v1071, 0.0
    %1090 = vadd.xlane.f32.xlu0 %v1089
    %v1091 = vpop.xlane.xlu0 %1090
    %v1092 = vsel %vm364, %v1073, 0.0
    %1093 = vadd.xlane.f32.xlu0 %v1092
    %v1094 = vpop.xlane.xlu0 %1093
    %v1095 = vsel %vm364, %v1075, 0.0
    %1096 = vadd.xlane.f32.xlu0 %v1095
    %v1097 = vpop.xlane.xlu0 %1096
    %v1098 = vsel %vm364, %v1077, 0.0
    %1099 = vadd.xlane.f32.xlu0 %v1098
    %v1100 = vpop.xlane.xlu0 %1099
    %v1101 = vsel %vm364, %v1079, 0.0
    %1102 = vadd.xlane.f32.xlu0 %v1101
    %v1103 = vpop.xlane.xlu0 %1102
    %v1104 = vrcp.pop %v1082
    %v1105 = vrcp.pop %v1085
    %v1106 = vrcp.pop %v1088
    %v1107 = vrcp.pop %v1091
    %v1108 = vrcp.pop %v1094
    %v1109 = vrcp.pop %v1097
    %v1110 = vrcp.pop %v1100
    %v1111 = vrcp.pop %v1103
    %v1112 = vmul.f32 %v1065, %v1104
    %v1113 = vmul.f32 %v1067, %v1105
    %v1114 = vmul.f32 %v1069, %v1106
    %v1115 = vmul.f32 %v1071, %v1107
    %v1116 = vmul.f32 %v1073, %v1108
    %v1117 = vmul.f32 %v1075, %v1109
    %v1118 = vmul.f32 %v1077, %v1110
    %v1119 = vmul.f32 %v1079, %v1111
    %v1120 = vpack.c.bf16 %v1112, %v1112
    %v1121 = vpack.c.bf16 %v1113, %v1113
    %v1122 = vpack.c.bf16 %v1114, %v1114
    %v1123 = vpack.c.bf16 %v1115, %v1115
    %v1124 = vpack.c.bf16 %v1116, %v1116
    %v1125 = vpack.c.bf16 %v1117, %v1117
    %v1126 = vpack.c.bf16 %v1118, %v1118
    %v1127 = vpack.c.bf16 %v1119, %v1119
    %v1129 = vsel %vm364, %v1120, 0
    %v1132 = vsel %vm377, %v656, 0
    %1134 = vmatprep.subr.bf16.mxu0 0
    %1135 = vmatpush1.bf16.msra.mxu0 %v1132
    %1136 = vmatprep.subr.bf16.mxu0 0
    %1137 = vmatpush1.bf16.msra.mxu0 0
    %1138 = vmatprep.subr.bf16.mxu0 0
    %1139 = vmatpush1.bf16.msra.mxu0 0
    %1140 = vmatprep.subr.bf16.mxu0 0
    %1141 = vmatpush1.bf16.msra.mxu0 0
    %1142 = vmatprep.subr.bf16.mxu0 0
    %1143 = vmatpush1.bf16.msra.mxu0 0
    %1144 = vmatprep.subr.bf16.mxu0 0
    %1145 = vmatpush1.bf16.msra.mxu0 0
    %1146 = vmatprep.subr.bf16.mxu0 0
    %1147 = vmatpush1.bf16.msra.mxu0 0
    %1148 = vmatprep.subr.bf16.mxu0 0
    %1149 = vmatpush1.bf16.msra.mxu0 0
    %1150 = vmatprep.subr.bf16.mxu0 0
    %1151 = vmatpush1.bf16.msra.mxu0 0
    %1152 = vmatprep.subr.bf16.mxu0 0
    %1153 = vmatpush1.bf16.msra.mxu0 0
    %1154 = vmatprep.subr.bf16.mxu0 0
    %1155 = vmatpush1.bf16.msra.mxu0 0
    %1156 = vmatprep.subr.bf16.mxu0 0
    %1157 = vmatpush1.bf16.msra.mxu0 0
    %1158 = vmatprep.subr.bf16.mxu0 0
    %1159 = vmatpush1.bf16.msra.mxu0 0
    %1160 = vmatprep.subr.bf16.mxu0 0
    %1161 = vmatpush1.bf16.msra.mxu0 0
    %1162 = vmatprep.subr.bf16.mxu0 0
    %1163 = vmatpush1.bf16.msra.mxu0 0
    %1164 = vmatprep.subr.bf16.mxu0 0
    %1165 = vmatpush1.bf16.msra.mxu0 0
    %1166 = vmatprep.mubr.bf16.mxu0 0
    %1167 = vmatmul.mubr.bf16.gmra.mrb[0].mxu0 %v1129
    %v1168 = vpop.f32.mrb[0].mxu0
    %v1169 = vadd.f32 0.0, %v1168
    %v1170 = vpop.f32.mrb[0].mxu0
    %v1171 = vpop.f32.mrb[0].mxu0
    %v1172 = vpop.f32.mrb[0].mxu0
    %1173 = vdwg.mxu0
    %v1175 = vsel %vm364, %v1121, 0
    %v1178 = vsel %vm377, %v657, 0
    %1180 = vmatprep.subr.bf16.mxu0 0
    %1181 = vmatpush1.bf16.msra.mxu0 %v1178
    %1182 = vmatprep.subr.bf16.mxu0 0
    %1183 = vmatpush1.bf16.msra.mxu0 0
    %1184 = vmatprep.subr.bf16.mxu0 0
    %1185 = vmatpush1.bf16.msra.mxu0 0
    %1186 = vmatprep.subr.bf16.mxu0 0
    %1187 = vmatpush1.bf16.msra.mxu0 0
    %1188 = vmatprep.subr.bf16.mxu0 0
    %1189 = vmatpush1.bf16.msra.mxu0 0
    %1190 = vmatprep.subr.bf16.mxu0 0
    %1191 = vmatpush1.bf16.msra.mxu0 0
    %1192 = vmatprep.subr.bf16.mxu0 0
    %1193 = vmatpush1.bf16.msra.mxu0 0
    %1194 = vmatprep.subr.bf16.mxu0 0
    %1195 = vmatpush1.bf16.msra.mxu0 0
    %1196 = vmatprep.subr.bf16.mxu0 0
    %1197 = vmatpush1.bf16.msra.mxu0 0
    %1198 = vmatprep.subr.bf16.mxu0 0
    %1199 = vmatpush1.bf16.msra.mxu0 0
    %1200 = vmatprep.subr.bf16.mxu0 0
    %1201 = vmatpush1.bf16.msra.mxu0 0
    %1202 = vmatprep.subr.bf16.mxu0 0
    %1203 = vmatpush1.bf16.msra.mxu0 0
    %1204 = vmatprep.subr.bf16.mxu0 0
    %1205 = vmatpush1.bf16.msra.mxu0 0
    %1206 = vmatprep.subr.bf16.mxu0 0
    %1207 = vmatpush1.bf16.msra.mxu0 0
    %1208 = vmatprep.subr.bf16.mxu0 0
    %1209 = vmatpush1.bf16.msra.mxu0 0
    %1210 = vmatprep.subr.bf16.mxu0 0
    %1211 = vmatpush1.bf16.msra.mxu0 0
    %1212 = vmatprep.mubr.bf16.mxu0 0
    %1213 = vmatmul.mubr.bf16.gmra.mrb[0].mxu0 %v1175
    %v1214 = vpop.f32.mrb[0].mxu0
    %v1215 = vadd.f32 0.0, %v1214
    %v1216 = vpop.f32.mrb[0].mxu0
    %v1217 = vpop.f32.mrb[0].mxu0
    %v1218 = vpop.f32.mrb[0].mxu0
    %1219 = vdwg.mxu0
    %v1221 = vsel %vm364, %v1122, 0
    %v1224 = vsel %vm377, %v658, 0
    %1226 = vmatprep.subr.bf16.mxu0 0
    %1227 = vmatpush1.bf16.msra.mxu0 %v1224
    %1228 = vmatprep.subr.bf16.mxu0 0
    %1229 = vmatpush1.bf16.msra.mxu0 0
    %1230 = vmatprep.subr.bf16.mxu0 0
    %1231 = vmatpush1.bf16.msra.mxu0 0
    %1232 = vmatprep.subr.bf16.mxu0 0
    %1233 = vmatpush1.bf16.msra.mxu0 0
    %1234 = vmatprep.subr.bf16.mxu0 0
    %1235 = vmatpush1.bf16.msra.mxu0 0
    %1236 = vmatprep.subr.bf16.mxu0 0
    %1237 = vmatpush1.bf16.msra.mxu0 0
    %1238 = vmatprep.subr.bf16.mxu0 0
    %1239 = vmatpush1.bf16.msra.mxu0 0
    %1240 = vmatprep.subr.bf16.mxu0 0
    %1241 = vmatpush1.bf16.msra.mxu0 0
    %1242 = vmatprep.subr.bf16.mxu0 0
    %1243 = vmatpush1.bf16.msra.mxu0 0
    %1244 = vmatprep.subr.bf16.mxu0 0
    %1245 = vmatpush1.bf16.msra.mxu0 0
    %1246 = vmatprep.subr.bf16.mxu0 0
    %1247 = vmatpush1.bf16.msra.mxu0 0
    %1248 = vmatprep.subr.bf16.mxu0 0
    %1249 = vmatpush1.bf16.msra.mxu0 0
    %1250 = vmatprep.subr.bf16.mxu0 0
    %1251 = vmatpush1.bf16.msra.mxu0 0
    %1252 = vmatprep.subr.bf16.mxu0 0
    %1253 = vmatpush1.bf16.msra.mxu0 0
    %1254 = vmatprep.subr.bf16.mxu0 0
    %1255 = vmatpush1.bf16.msra.mxu0 0
    %1256 = vmatprep.subr.bf16.mxu0 0
    %1257 = vmatpush1.bf16.msra.mxu0 0
    %1258 = vmatprep.mubr.bf16.mxu0 0
    %1259 = vmatmul.mubr.bf16.gmra.mrb[0].mxu0 %v1221
    %v1260 = vpop.f32.mrb[0].mxu0
    %v1261 = vadd.f32 0.0, %v1260
    %v1262 = vpop.f32.mrb[0].mxu0
    %v1263 = vpop.f32.mrb[0].mxu0
    %v1264 = vpop.f32.mrb[0].mxu0
    %1265 = vdwg.mxu0
    %v1267 = vsel %vm364, %v1123, 0
    %v1270 = vsel %vm377, %v659, 0
    %1272 = vmatprep.subr.bf16.mxu0 0
    %1273 = vmatpush1.bf16.msra.mxu0 %v1270
    %1274 = vmatprep.subr.bf16.mxu0 0
    %1275 = vmatpush1.bf16.msra.mxu0 0
    %1276 = vmatprep.subr.bf16.mxu0 0
    %1277 = vmatpush1.bf16.msra.mxu0 0
    %1278 = vmatprep.subr.bf16.mxu0 0
    %1279 = vmatpush1.bf16.msra.mxu0 0
    %1280 = vmatprep.subr.bf16.mxu0 0
    %1281 = vmatpush1.bf16.msra.mxu0 0
    %1282 = vmatprep.subr.bf16.mxu0 0
    %1283 = vmatpush1.bf16.msra.mxu0 0
    %1284 = vmatprep.subr.bf16.mxu0 0
    %1285 = vmatpush1.bf16.msra.mxu0 0
    %1286 = vmatprep.subr.bf16.mxu0 0
    %1287 = vmatpush1.bf16.msra.mxu0 0
    %1288 = vmatprep.subr.bf16.mxu0 0
    %1289 = vmatpush1.bf16.msra.mxu0 0
    %1290 = vmatprep.subr.bf16.mxu0 0
    %1291 = vmatpush1.bf16.msra.mxu0 0
    %1292 = vmatprep.subr.bf16.mxu0 0
    %1293 = vmatpush1.bf16.msra.mxu0 0
    %1294 = vmatprep.subr.bf16.mxu0 0
    %1295 = vmatpush1.bf16.msra.mxu0 0
    %1296 = vmatprep.subr.bf16.mxu0 0
    %1297 = vmatpush1.bf16.msra.mxu0 0
    %1298 = vmatprep.subr.bf16.mxu0 0
    %1299 = vmatpush1.bf16.msra.mxu0 0
    %1300 = vmatprep.subr.bf16.mxu0 0
    %1301 = vmatpush1.bf16.msra.mxu0 0
    %1302 = vmatprep.subr.bf16.mxu0 0
    %1303 = vmatpush1.bf16.msra.mxu0 0
    %1304 = vmatprep.mubr.bf16.mxu0 0
    %1305 = vmatmul.mubr.bf16.gmra.mrb[0].mxu0 %v1267
    %v1306 = vpop.f32.mrb[0].mxu0
    %v1307 = vadd.f32 0.0, %v1306
    %v1308 = vpop.f32.mrb[0].mxu0
    %v1309 = vpop.f32.mrb[0].mxu0
    %v1310 = vpop.f32.mrb[0].mxu0
    %1311 = vdwg.mxu0
    %v1313 = vsel %vm364, %v1124, 0
    %v1316 = vsel %vm377, %v660, 0
    %1318 = vmatprep.subr.bf16.mxu0 0
    %1319 = vmatpush1.bf16.msra.mxu0 %v1316
    %1320 = vmatprep.subr.bf16.mxu0 0
    %1321 = vmatpush1.bf16.msra.mxu0 0
    %1322 = vmatprep.subr.bf16.mxu0 0
    %1323 = vmatpush1.bf16.msra.mxu0 0
    %1324 = vmatprep.subr.bf16.mxu0 0
    %1325 = vmatpush1.bf16.msra.mxu0 0
    %1326 = vmatprep.subr.bf16.mxu0 0
    %1327 = vmatpush1.bf16.msra.mxu0 0
    %1328 = vmatprep.subr.bf16.mxu0 0
    %1329 = vmatpush1.bf16.msra.mxu0 0
    %1330 = vmatprep.subr.bf16.mxu0 0
    %1331 = vmatpush1.bf16.msra.mxu0 0
    %1332 = vmatprep.subr.bf16.mxu0 0
    %1333 = vmatpush1.bf16.msra.mxu0 0
    %1334 = vmatprep.subr.bf16.mxu0 0
    %1335 = vmatpush1.bf16.msra.mxu0 0
    %1336 = vmatprep.subr.bf16.mxu0 0
    %1337 = vmatpush1.bf16.msra.mxu0 0
    %1338 = vmatprep.subr.bf16.mxu0 0
    %1339 = vmatpush1.bf16.msra.mxu0 0
    %1340 = vmatprep.subr.bf16.mxu0 0
    %1341 = vmatpush1.bf16.msra.mxu0 0
    %1342 = vmatprep.subr.bf16.mxu0 0
    %1343 = vmatpush1.bf16.msra.mxu0 0
    %1344 = vmatprep.subr.bf16.mxu0 0
    %1345 = vmatpush1.bf16.msra.mxu0 0
    %1346 = vmatprep.subr.bf16.mxu0 0
    %1347 = vmatpush1.bf16.msra.mxu0 0
    %1348 = vmatprep.subr.bf16.mxu0 0
    %1349 = vmatpush1.bf16.msra.mxu0 0
    %1350 = vmatprep.mubr.bf16.mxu0 0
    %1351 = vmatmul.mubr.bf16.gmra.mrb[0].mxu0 %v1313
    %v1352 = vpop.f32.mrb[0].mxu0
    %v1353 = vadd.f32 0.0, %v1352
    %v1354 = vpop.f32.mrb[0].mxu0
    %v1355 = vpop.f32.mrb[0].mxu0
    %v1356 = vpop.f32.mrb[0].mxu0
    %1357 = vdwg.mxu0
    %v1359 = vsel %vm364, %v1125, 0
    %v1362 = vsel %vm377, %v661, 0
    %1364 = vmatprep.subr.bf16.mxu0 0
    %1365 = vmatpush1.bf16.msra.mxu0 %v1362
    %1366 = vmatprep.subr.bf16.mxu0 0
    %1367 = vmatpush1.bf16.msra.mxu0 0
    %1368 = vmatprep.subr.bf16.mxu0 0
    %1369 = vmatpush1.bf16.msra.mxu0 0
    %1370 = vmatprep.subr.bf16.mxu0 0
    %1371 = vmatpush1.bf16.msra.mxu0 0
    %1372 = vmatprep.subr.bf16.mxu0 0
    %1373 = vmatpush1.bf16.msra.mxu0 0
    %1374 = vmatprep.subr.bf16.mxu0 0
    %1375 = vmatpush1.bf16.msra.mxu0 0
    %1376 = vmatprep.subr.bf16.mxu0 0
    %1377 = vmatpush1.bf16.msra.mxu0 0
    %1378 = vmatprep.subr.bf16.mxu0 0
    %1379 = vmatpush1.bf16.msra.mxu0 0
    %1380 = vmatprep.subr.bf16.mxu0 0
    %1381 = vmatpush1.bf16.msra.mxu0 0
    %1382 = vmatprep.subr.bf16.mxu0 0
    %1383 = vmatpush1.bf16.msra.mxu0 0
    %1384 = vmatprep.subr.bf16.mxu0 0
    %1385 = vmatpush1.bf16.msra.mxu0 0
    %1386 = vmatprep.subr.bf16.mxu0 0
    %1387 = vmatpush1.bf16.msra.mxu0 0
    %1388 = vmatprep.subr.bf16.mxu0 0
    %1389 = vmatpush1.bf16.msra.mxu0 0
    %1390 = vmatprep.subr.bf16.mxu0 0
    %1391 = vmatpush1.bf16.msra.mxu0 0
    %1392 = vmatprep.subr.bf16.mxu0 0
    %1393 = vmatpush1.bf16.msra.mxu0 0
    %1394 = vmatprep.subr.bf16.mxu0 0
    %1395 = vmatpush1.bf16.msra.mxu0 0
    %1396 = vmatprep.mubr.bf16.mxu0 0
    %1397 = vmatmul.mubr.bf16.gmra.mrb[0].mxu0 %v1359
    %v1398 = vpop.f32.mrb[0].mxu0
    %v1399 = vadd.f32 0.0, %v1398
    %v1400 = vpop.f32.mrb[0].mxu0
    %v1401 = vpop.f32.mrb[0].mxu0
    %v1402 = vpop.f32.mrb[0].mxu0
    %1403 = vdwg.mxu0
    %v1405 = vsel %vm364, %v1126, 0
    %v1408 = vsel %vm377, %v662, 0
    %1410 = vmatprep.subr.bf16.mxu0 0
    %1411 = vmatpush1.bf16.msra.mxu0 %v1408
    %1412 = vmatprep.subr.bf16.mxu0 0
    %1413 = vmatpush1.bf16.msra.mxu0 0
    %1414 = vmatprep.subr.bf16.mxu0 0
    %1415 = vmatpush1.bf16.msra.mxu0 0
    %1416 = vmatprep.subr.bf16.mxu0 0
    %1417 = vmatpush1.bf16.msra.mxu0 0
    %1418 = vmatprep.subr.bf16.mxu0 0
    %1419 = vmatpush1.bf16.msra.mxu0 0
    %1420 = vmatprep.subr.bf16.mxu0 0
    %1421 = vmatpush1.bf16.msra.mxu0 0
    %1422 = vmatprep.subr.bf16.mxu0 0
    %1423 = vmatpush1.bf16.msra.mxu0 0
    %1424 = vmatprep.subr.bf16.mxu0 0
    %1425 = vmatpush1.bf16.msra.mxu0 0
    %1426 = vmatprep.subr.bf16.mxu0 0
    %1427 = vmatpush1.bf16.msra.mxu0 0
    %1428 = vmatprep.subr.bf16.mxu0 0
    %1429 = vmatpush1.bf16.msra.mxu0 0
    %1430 = vmatprep.subr.bf16.mxu0 0
    %1431 = vmatpush1.bf16.msra.mxu0 0
    %1432 = vmatprep.subr.bf16.mxu0 0
    %1433 = vmatpush1.bf16.msra.mxu0 0
    %1434 = vmatprep.subr.bf16.mxu0 0
    %1435 = vmatpush1.bf16.msra.mxu0 0
    %1436 = vmatprep.subr.bf16.mxu0 0
    %1437 = vmatpush1.bf16.msra.mxu0 0
    %1438 = vmatprep.subr.bf16.mxu0 0
    %1439 = vmatpush1.bf16.msra.mxu0 0
    %1440 = vmatprep.subr.bf16.mxu0 0
    %1441 = vmatpush1.bf16.msra.mxu0 0
    %1442 = vmatprep.mubr.bf16.mxu0 0
    %1443 = vmatmul.mubr.bf16.gmra.mrb[0].mxu0 %v1405
    %v1444 = vpop.f32.mrb[0].mxu0
    %v1445 = vadd.f32 0.0, %v1444
    %v1446 = vpop.f32.mrb[0].mxu0
    %v1447 = vpop.f32.mrb[0].mxu0
    %v1448 = vpop.f32.mrb[0].mxu0
    %1449 = vdwg.mxu0
    %v1451 = vsel %vm364, %v1127, 0
    %v1454 = vsel %vm377, %v663, 0
    %1456 = vmatprep.subr.bf16.mxu0 0
    %1457 = vmatpush1.bf16.msra.mxu0 %v1454
    %1458 = vmatprep.subr.bf16.mxu0 0
    %1459 = vmatpush1.bf16.msra.mxu0 0
    %1460 = vmatprep.subr.bf16.mxu0 0
    %1461 = vmatpush1.bf16.msra.mxu0 0
    %1462 = vmatprep.subr.bf16.mxu0 0
    %1463 = vmatpush1.bf16.msra.mxu0 0
    %1464 = vmatprep.subr.bf16.mxu0 0
    %1465 = vmatpush1.bf16.msra.mxu0 0
    %1466 = vmatprep.subr.bf16.mxu0 0
    %1467 = vmatpush1.bf16.msra.mxu0 0
    %1468 = vmatprep.subr.bf16.mxu0 0
    %1469 = vmatpush1.bf16.msra.mxu0 0
    %1470 = vmatprep.subr.bf16.mxu0 0
    %1471 = vmatpush1.bf16.msra.mxu0 0
    %1472 = vmatprep.subr.bf16.mxu0 0
    %1473 = vmatpush1.bf16.msra.mxu0 0
    %1474 = vmatprep.subr.bf16.mxu0 0
    %1475 = vmatpush1.bf16.msra.mxu0 0
    %1476 = vmatprep.subr.bf16.mxu0 0
    %1477 = vmatpush1.bf16.msra.mxu0 0
    %1478 = vmatprep.subr.bf16.mxu0 0
    %1479 = vmatpush1.bf16.msra.mxu0 0
    %1480 = vmatprep.subr.bf16.mxu0 0
    %1481 = vmatpush1.bf16.msra.mxu0 0
    %1482 = vmatprep.subr.bf16.mxu0 0
    %1483 = vmatpush1.bf16.msra.mxu0 0
    %1484 = vmatprep.subr.bf16.mxu0 0
    %1485 = vmatpush1.bf16.msra.mxu0 0
    %1486 = vmatprep.subr.bf16.mxu0 0
    %1487 = vmatpush1.bf16.msra.mxu0 0
    %1488 = vmatprep.mubr.bf16.mxu0 0
    %1489 = vmatmul.mubr.bf16.gmra.mrb[0].mxu0 %v1451
    %v1490 = vpop.f32.mrb[0].mxu0
    %v1491 = vadd.f32 0.0, %v1490
    %v1492 = vpop.f32.mrb[0].mxu0
    %v1493 = vpop.f32.mrb[0].mxu0
    %v1494 = vpop.f32.mrb[0].mxu0
    %1495 = vdwg.mxu0
    %v1496 = vpack.c.bf16 %v1169, %v1169
    %v1497 = vpack.c.bf16 %v1215, %v1215
    %v1498 = vpack.c.bf16 %v1261, %v1261
    %v1499 = vpack.c.bf16 %v1307, %v1307
    %v1500 = vpack.c.bf16 %v1353, %v1353
    %v1501 = vpack.c.bf16 %v1399, %v1399
    %v1502 = vpack.c.bf16 %v1445, %v1445
    %v1503 = vpack.c.bf16 %v1491, %v1491
    %v1504 = vld [vmem:[%s4] sm:$0xf]
    %v1505 = vld [vmem:[%s4 + $0x4] sm:$0xf]
    %v1506 = vld [vmem:[%s4 + $0x8] sm:$0xf]
    %v1507 = vld [vmem:[%s4 + $0xc] sm:$0xf]
    %v1510 = vunpack.c.l.b16 %v1496
    %v1511 = vunpack.c.l.b16 %v1497
    %v1512 = vpack.c.b16 %v1511, %v1510
    %v1514 = vsel %vm364, %v1512, 0
    %v1517 = vsel %vm377, %v1504, 0
    %1519 = vmatprep.subr.bf16.mxu0 0
    %1520 = vmatpush1.bf16.msra.mxu0 %v1517
    %1521 = vmatprep.subr.bf16.mxu0 0
    %1522 = vmatpush1.bf16.msra.mxu0 0
    %1523 = vmatprep.subr.bf16.mxu0 0
    %1524 = vmatpush1.bf16.msra.mxu0 0
    %1525 = vmatprep.subr.bf16.mxu0 0
    %1526 = vmatpush1.bf16.msra.mxu0 0
    %1527 = vmatprep.subr.bf16.mxu0 0
    %1528 = vmatpush1.bf16.msra.mxu0 0
    %1529 = vmatprep.subr.bf16.mxu0 0
    %1530 = vmatpush1.bf16.msra.mxu0 0
    %1531 = vmatprep.subr.bf16.mxu0 0
    %1532 = vmatpush1.bf16.msra.mxu0 0
    %1533 = vmatprep.subr.bf16.mxu0 0
    %1534 = vmatpush1.bf16.msra.mxu0 0
    %1535 = vmatprep.subr.bf16.mxu0 0
    %1536 = vmatpush1.bf16.msra.mxu0 0
    %1537 = vmatprep.subr.bf16.mxu0 0
    %1538 = vmatpush1.bf16.msra.mxu0 0
    %1539 = vmatprep.subr.bf16.mxu0 0
    %1540 = vmatpush1.bf16.msra.mxu0 0
    %1541 = vmatprep.subr.bf16.mxu0 0
    %1542 = vmatpush1.bf16.msra.mxu0 0
    %1543 = vmatprep.subr.bf16.mxu0 0
    %1544 = vmatpush1.bf16.msra.mxu0 0
    %1545 = vmatprep.subr.bf16.mxu0 0
    %1546 = vmatpush1.bf16.msra.mxu0 0
    %1547 = vmatprep.subr.bf16.mxu0 0
    %1548 = vmatpush1.bf16.msra.mxu0 0
    %1549 = vmatprep.subr.bf16.mxu0 0
    %1550 = vmatpush1.bf16.msra.mxu0 0
    %1551 = vmatprep.mubr.bf16.mxu0 0
    %1552 = vmatmul.mubr.bf16.gmra.mrb[0].mxu0 %v1514
    %v1553 = vpop.f32.mrb[0].mxu0
    %v1554 = vadd.f32 0.0, %v1553
    %v1555 = vpop.f32.mrb[0].mxu0
    %v1556 = vpop.f32.mrb[0].mxu0
    %v1557 = vadd.f32 0.0, %v1556
    %v1558 = vpop.f32.mrb[0].mxu0
    %1559 = vdwg.mxu0
    %v1562 = vunpack.c.l.b16 %v1498
    %v1563 = vunpack.c.l.b16 %v1499
    %v1564 = vpack.c.b16 %v1563, %v1562
    %v1566 = vsel %vm364, %v1564, 0
    %v1569 = vsel %vm377, %v1505, 0
    %1571 = vmatprep.subr.bf16.mxu0 0
    %1572 = vmatpush1.bf16.msra.mxu0 %v1569
    %1573 = vmatprep.subr.bf16.mxu0 0
    %1574 = vmatpush1.bf16.msra.mxu0 0
    %1575 = vmatprep.subr.bf16.mxu0 0
    %1576 = vmatpush1.bf16.msra.mxu0 0
    %1577 = vmatprep.subr.bf16.mxu0 0
    %1578 = vmatpush1.bf16.msra.mxu0 0
    %1579 = vmatprep.subr.bf16.mxu0 0
    %1580 = vmatpush1.bf16.msra.mxu0 0
    %1581 = vmatprep.subr.bf16.mxu0 0
    %1582 = vmatpush1.bf16.msra.mxu0 0
    %1583 = vmatprep.subr.bf16.mxu0 0
    %1584 = vmatpush1.bf16.msra.mxu0 0
    %1585 = vmatprep.subr.bf16.mxu0 0
    %1586 = vmatpush1.bf16.msra.mxu0 0
    %1587 = vmatprep.subr.bf16.mxu0 0
    %1588 = vmatpush1.bf16.msra.mxu0 0
    %1589 = vmatprep.subr.bf16.mxu0 0
    %1590 = vmatpush1.bf16.msra.mxu0 0
    %1591 = vmatprep.subr.bf16.mxu0 0
    %1592 = vmatpush1.bf16.msra.mxu0 0
    %1593 = vmatprep.subr.bf16.mxu0 0
    %1594 = vmatpush1.bf16.msra.mxu0 0
    %1595 = vmatprep.subr.bf16.mxu0 0
    %1596 = vmatpush1.bf16.msra.mxu0 0
    %1597 = vmatprep.subr.bf16.mxu0 0
    %1598 = vmatpush1.bf16.msra.mxu0 0
    %1599 = vmatprep.subr.bf16.mxu0 0
    %1600 = vmatpush1.bf16.msra.mxu0 0
    %1601 = vmatprep.subr.bf16.mxu0 0
    %1602 = vmatpush1.bf16.msra.mxu0 0
    %1603 = vmatprep.mubr.bf16.mxu0 0
    %1604 = vmatmul.mubr.bf16.gmra.mrb[0].mxu0 %v1566
    %v1605 = vpop.f32.mrb[0].mxu0
    %v1606 = vadd.f32 0.0, %v1605
    %v1607 = vpop.f32.mrb[0].mxu0
    %v1608 = vpop.f32.mrb[0].mxu0
    %v1609 = vadd.f32 0.0, %v1608
    %v1610 = vpop.f32.mrb[0].mxu0
    %1611 = vdwg.mxu0
    %v1614 = vunpack.c.l.b16 %v1500
    %v1615 = vunpack.c.l.b16 %v1501
    %v1616 = vpack.c.b16 %v1615, %v1614
    %v1618 = vsel %vm364, %v1616, 0
    %v1621 = vsel %vm377, %v1506, 0
    %1623 = vmatprep.subr.bf16.mxu0 0
    %1624 = vmatpush1.bf16.msra.mxu0 %v1621
    %1625 = vmatprep.subr.bf16.mxu0 0
    %1626 = vmatpush1.bf16.msra.mxu0 0
    %1627 = vmatprep.subr.bf16.mxu0 0
    %1628 = vmatpush1.bf16.msra.mxu0 0
    %1629 = vmatprep.subr.bf16.mxu0 0
    %1630 = vmatpush1.bf16.msra.mxu0 0
    %1631 = vmatprep.subr.bf16.mxu0 0
    %1632 = vmatpush1.bf16.msra.mxu0 0
    %1633 = vmatprep.subr.bf16.mxu0 0
    %1634 = vmatpush1.bf16.msra.mxu0 0
    %1635 = vmatprep.subr.bf16.mxu0 0
    %1636 = vmatpush1.bf16.msra.mxu0 0
    %1637 = vmatprep.subr.bf16.mxu0 0
    %1638 = vmatpush1.bf16.msra.mxu0 0
    %1639 = vmatprep.subr.bf16.mxu0 0
    %1640 = vmatpush1.bf16.msra.mxu0 0
    %1641 = vmatprep.subr.bf16.mxu0 0
    %1642 = vmatpush1.bf16.msra.mxu0 0
    %1643 = vmatprep.subr.bf16.mxu0 0
    %1644 = vmatpush1.bf16.msra.mxu0 0
    %1645 = vmatprep.subr.bf16.mxu0 0
    %1646 = vmatpush1.bf16.msra.mxu0 0
    %1647 = vmatprep.subr.bf16.mxu0 0
    %1648 = vmatpush1.bf16.msra.mxu0 0
    %1649 = vmatprep.subr.bf16.mxu0 0
    %1650 = vmatpush1.bf16.msra.mxu0 0
    %1651 = vmatprep.subr.bf16.mxu0 0
    %1652 = vmatpush1.bf16.msra.mxu0 0
    %1653 = vmatprep.subr.bf16.mxu0 0
    %1654 = vmatpush1.bf16.msra.mxu0 0
    %1655 = vmatprep.mubr.bf16.mxu0 0
    %1656 = vmatmul.mubr.bf16.gmra.mrb[0].mxu0 %v1618
    %v1657 = vpop.f32.mrb[0].mxu0
    %v1658 = vadd.f32 0.0, %v1657
    %v1659 = vpop.f32.mrb[0].mxu0
    %v1660 = vpop.f32.mrb[0].mxu0
    %v1661 = vadd.f32 0.0, %v1660
    %v1662 = vpop.f32.mrb[0].mxu0
    %1663 = vdwg.mxu0
    %v1666 = vunpack.c.l.b16 %v1502
    %v1667 = vunpack.c.l.b16 %v1503
    %v1668 = vpack.c.b16 %v1667, %v1666
    %v1670 = vsel %vm364, %v1668, 0
    %v1673 = vsel %vm377, %v1507, 0
    %1675 = vmatprep.subr.bf16.mxu0 0
    %1676 = vmatpush1.bf16.msra.mxu0 %v1673
    %1677 = vmatprep.subr.bf16.mxu0 0
    %1678 = vmatpush1.bf16.msra.mxu0 0
    %1679 = vmatprep.subr.bf16.mxu0 0
    %1680 = vmatpush1.bf16.msra.mxu0 0
    %1681 = vmatprep.subr.bf16.mxu0 0
    %1682 = vmatpush1.bf16.msra.mxu0 0
    %1683 = vmatprep.subr.bf16.mxu0 0
    %1684 = vmatpush1.bf16.msra.mxu0 0
    %1685 = vmatprep.subr.bf16.mxu0 0
    %1686 = vmatpush1.bf16.msra.mxu0 0
    %1687 = vmatprep.subr.bf16.mxu0 0
    %1688 = vmatpush1.bf16.msra.mxu0 0
    %1689 = vmatprep.subr.bf16.mxu0 0
    %1690 = vmatpush1.bf16.msra.mxu0 0
    %1691 = vmatprep.subr.bf16.mxu0 0
    %1692 = vmatpush1.bf16.msra.mxu0 0
    %1693 = vmatprep.subr.bf16.mxu0 0
    %1694 = vmatpush1.bf16.msra.mxu0 0
    %1695 = vmatprep.subr.bf16.mxu0 0
    %1696 = vmatpush1.bf16.msra.mxu0 0
    %1697 = vmatprep.subr.bf16.mxu0 0
    %1698 = vmatpush1.bf16.msra.mxu0 0
    %1699 = vmatprep.subr.bf16.mxu0 0
    %1700 = vmatpush1.bf16.msra.mxu0 0
    %1701 = vmatprep.subr.bf16.mxu0 0
    %1702 = vmatpush1.bf16.msra.mxu0 0
    %1703 = vmatprep.subr.bf16.mxu0 0
    %1704 = vmatpush1.bf16.msra.mxu0 0
    %1705 = vmatprep.subr.bf16.mxu0 0
    %1706 = vmatpush1.bf16.msra.mxu0 0
    %1707 = vmatprep.mubr.bf16.mxu0 0
    %1708 = vmatmul.mubr.bf16.gmra.mrb[0].mxu0 %v1670
    %v1709 = vpop.f32.mrb[0].mxu0
    %v1710 = vadd.f32 0.0, %v1709
    %v1711 = vpop.f32.mrb[0].mxu0
    %v1712 = vpop.f32.mrb[0].mxu0
    %v1713 = vadd.f32 0.0, %v1712
    %v1714 = vpop.f32.mrb[0].mxu0
    %1715 = vdwg.mxu0
    %vm1716 = vcmask 261120
    %v1717 = vsel %vm1716, %v1554, 0.0
    %v1718 = vsel %vm1716, %v1606, 0.0
    %v1719 = vadd.f32 %v1717, %v1718
    %v1720 = vsel %vm1716, %v1658, 0.0
    %v1721 = vadd.f32 %v1719, %v1720
    %v1722 = vsel %vm1716, %v1710, 0.0
    %v1723 = vadd.f32 %v1721, %v1722
    %v1724 = vsel %vm1716, %v1557, 0.0
    %v1725 = vsel %vm1716, %v1609, 0.0
    %v1726 = vadd.f32 %v1724, %v1725
    %v1727 = vsel %vm1716, %v1661, 0.0
    %v1728 = vadd.f32 %v1726, %v1727
    %v1729 = vsel %vm1716, %v1713, 0.0
    %v1730 = vadd.f32 %v1728, %v1729
    %v1731 = vld [vmem:[%s5] sm:$0x1]
    %v1733 = vlaneseq
    %v1734 = vshrl.u32 %v1733, 7
    %v1735 = vsub.s32 0, %v1734
    %v1736 = vrot.slane %v1731, %v1735
    %v1738 = vadd.f32 %v1723, %v1736
    %v1739 = vadd.f32 %v1730, %v1736
    %v1740 = vadd.f32 %v1738, %v51
    %v1741 = vadd.f32 %v1739, %v52
    %v1742 = vld [vmem:[%s6] sm:$0x1]
    %v1743 = vld [vmem:[%s7] sm:$0x1]
    %v1744 = vsel %vm1716, %v1740, 0.0
    %1745 = vadd.xlane.f32.xlu0 %v1744
    %v1746 = vpop.xlane.xlu0 %1745
    %v1747 = vsel %vm1716, %v1741, 0.0
    %1748 = vadd.xlane.f32.xlu0 %v1747
    %v1749 = vpop.xlane.xlu0 %1748
    %v1750 = vrcp.pop 32.0
    %v1751 = vmul.f32 %v1746, %v1750
    %v1752 = vmul.f32 %v1749, %v1750
    %v1753 = vsub.f32 %v1740, %v1751
    %v1754 = vsub.f32 %v1741, %v1752
    %v1755 = vmul.f32 %v1753, %v1753
    %v1756 = vmul.f32 %v1754, %v1754
    %v1757 = vsel %vm1716, %v1755, 0.0
    %1758 = vadd.xlane.f32.xlu0 %v1757
    %v1759 = vpop.xlane.xlu0 %1758
    %v1760 = vsel %vm1716, %v1756, 0.0
    %1761 = vadd.xlane.f32.xlu0 %v1760
    %v1762 = vpop.xlane.xlu0 %1761
    %v1763 = vmul.f32 %v1759, %v1750
    %v1764 = vmul.f32 %v1762, %v1750
    %v1765 = vadd.f32 %v1763, 1e-05
    %v1766 = vadd.f32 %v1764, 1e-05
    %v1767 = vrsqrt.pop %v1765
    %v1768 = vrsqrt.pop %v1766
    %v1769 = vmul.f32 %v1753, %v1767
    %v1770 = vmul.f32 %v1754, %v1768
    %v1772 = vlaneseq
    %v1773 = vshrl.u32 %v1772, 7
    %v1774 = vsub.s32 0, %v1773
    %v1775 = vrot.slane %v1742, %v1774
    %v1777 = vmul.f32 %v1769, %v1775
    %v1778 = vmul.f32 %v1770, %v1775
    %v1780 = vlaneseq
    %v1781 = vshrl.u32 %v1780, 7
    %v1782 = vsub.s32 0, %v1781
    %v1783 = vrot.slane %v1743, %v1782
    %v1785 = vadd.f32 %v1777, %v1783
    %v1786 = vadd.f32 %v1778, %v1783
    %v1787 = vpack.c.bf16 %v1786, %v1785
    %v1788 = vld [vmem:[%s8] sm:$0xf]
    %v1789 = vld [vmem:[%s8 + $0x4] sm:$0xf]
    %v1790 = vld [vmem:[%s8 + $0x8] sm:$0xf]
    %v1791 = vld [vmem:[%s8 + $0xc] sm:$0xf]
    %v1792 = vld [vmem:[%s9] sm:$0x1]
    %v1794 = vlaneseq
    %v1795 = vshrl.u32 %v1794, 7
    %v1796 = vsub.s32 0, %v1795
    %v1797 = vrot.slane %v1792, %v1796
    %v1803 = vunpack.c.l.b16 %v1788
    %v1804 = vunpack.c.l.b16 %v1789
    %v1805 = vunpack.c.l.b16 %v1790
    %v1806 = vunpack.c.l.b16 %v1791
    %v1807 = vpack.c.b16 %v1804, %v1803
    %v1808 = vpack.c.b16 %v1806, %v1805
    %v1812 = vsel %vm1716, %v1787, 0
    %1814 = vmatprep.subr.bf16.mxu0 0
    %1815 = vmatpush1.bf16.msra.mxu0 %v1807
    %1816 = vmatprep.subr.bf16.mxu0 0
    %1817 = vmatpush1.bf16.msra.mxu0 %v1808
    %1818 = vmatprep.subr.bf16.mxu0 0
    %1819 = vmatpush1.bf16.msra.mxu0 0
    %1820 = vmatprep.subr.bf16.mxu0 0
    %1821 = vmatpush1.bf16.msra.mxu0 0
    %1822 = vmatprep.subr.bf16.mxu0 0
    %1823 = vmatpush1.bf16.msra.mxu0 0
    %1824 = vmatprep.subr.bf16.mxu0 0
    %1825 = vmatpush1.bf16.msra.mxu0 0
    %1826 = vmatprep.subr.bf16.mxu0 0
    %1827 = vmatpush1.bf16.msra.mxu0 0
    %1828 = vmatprep.subr.bf16.mxu0 0
    %1829 = vmatpush1.bf16.msra.mxu0 0
    %1830 = vmatprep.subr.bf16.mxu0 0
    %1831 = vmatpush1.bf16.msra.mxu0 0
    %1832 = vmatprep.subr.bf16.mxu0 0
    %1833 = vmatpush1.bf16.msra.mxu0 0
    %1834 = vmatprep.subr.bf16.mxu0 0
    %1835 = vmatpush1.bf16.msra.mxu0 0
    %1836 = vmatprep.subr.bf16.mxu0 0
    %1837 = vmatpush1.bf16.msra.mxu0 0
    %1838 = vmatprep.subr.bf16.mxu0 0
    %1839 = vmatpush1.bf16.msra.mxu0 0
    %1840 = vmatprep.subr.bf16.mxu0 0
    %1841 = vmatpush1.bf16.msra.mxu0 0
    %1842 = vmatprep.subr.bf16.mxu0 0
    %1843 = vmatpush1.bf16.msra.mxu0 0
    %1844 = vmatprep.subr.bf16.mxu0 0
    %1845 = vmatpush1.bf16.msra.mxu0 0
    %1846 = vmatprep.mubr.bf16.mxu0 0
    %1847 = vmatmul.mubr.bf16.gmra.mrb[0].mxu0 %v1812
    %v1848 = vpop.f32.mrb[0].mxu0
    %v1849 = vadd.f32 %v1797, %v1848
    %v1850 = vpop.f32.mrb[0].mxu0
    %v1851 = vpop.f32.mrb[0].mxu0
    %v1852 = vadd.f32 %v1797, %v1851
    %v1853 = vpop.f32.mrb[0].mxu0
    %1854 = vdwg.mxu0
    %v1855 = vmax.f32 %v1849, 0.0
    %v1856 = vmax.f32 %v1852, 0.0
    %v1857 = vpack.c.bf16 %v1856, %v1855
    %v1858 = vld [vmem:[%s10] sm:$0xf]
    %v1859 = vld [vmem:[%s10 + $0x4] sm:$0xf]
    %v1860 = vld [vmem:[%s10 + $0x8] sm:$0xf]
    %v1861 = vld [vmem:[%s10 + $0xc] sm:$0xf]
    %v1862 = vld [vmem:[%s10 + $0x10] sm:$0xf]
    %v1863 = vld [vmem:[%s10 + $0x14] sm:$0xf]
    %v1864 = vld [vmem:[%s10 + $0x18] sm:$0xf]
    %v1865 = vld [vmem:[%s10 + $0x1c] sm:$0xf]
    %v1866 = vld [vmem:[%s11] sm:$0x1]
    %v1868 = vlaneseq
    %v1869 = vshrl.u32 %v1868, 7
    %v1870 = vsub.s32 0, %v1869
    %v1871 = vrot.slane %v1866, %v1870
    %v1881 = vunpack.c.l.b16 %v1858
    %v1882 = vunpack.c.l.b16 %v1859
    %v1883 = vunpack.c.l.b16 %v1860
    %v1884 = vunpack.c.l.b16 %v1861
    %v1885 = vunpack.c.l.b16 %v1862
    %v1886 = vunpack.c.l.b16 %v1863
    %v1887 = vunpack.c.l.b16 %v1864
    %v1888 = vunpack.c.l.b16 %v1865
    %v1889 = vpack.c.b16 %v1882, %v1881
    %v1890 = vpack.c.b16 %v1884, %v1883
    %v1891 = vpack.c.b16 %v1886, %v1885
    %v1892 = vpack.c.b16 %v1888, %v1887
    %vm1897 = vcmask 523264
    %v1899 = vsel %vm1897, %v1857, 0
    %1901 = vmatprep.subr.bf16.mxu0 0
    %1902 = vmatpush1.bf16.msra.mxu0 %v1889
    %1903 = vmatprep.subr.bf16.mxu0 0
    %1904 = vmatpush1.bf16.msra.mxu0 %v1890
    %1905 = vmatprep.subr.bf16.mxu0 0
    %1906 = vmatpush1.bf16.msra.mxu0 %v1891
    %1907 = vmatprep.subr.bf16.mxu0 0
    %1908 = vmatpush1.bf16.msra.mxu0 %v1892
    %1909 = vmatprep.subr.bf16.mxu0 0
    %1910 = vmatpush1.bf16.msra.mxu0 0
    %1911 = vmatprep.subr.bf16.mxu0 0
    %1912 = vmatpush1.bf16.msra.mxu0 0
    %1913 = vmatprep.subr.bf16.mxu0 0
    %1914 = vmatpush1.bf16.msra.mxu0 0
    %1915 = vmatprep.subr.bf16.mxu0 0
    %1916 = vmatpush1.bf16.msra.mxu0 0
    %1917 = vmatprep.subr.bf16.mxu0 0
    %1918 = vmatpush1.bf16.msra.mxu0 0
    %1919 = vmatprep.subr.bf16.mxu0 0
    %1920 = vmatpush1.bf16.msra.mxu0 0
    %1921 = vmatprep.subr.bf16.mxu0 0
    %1922 = vmatpush1.bf16.msra.mxu0 0
    %1923 = vmatprep.subr.bf16.mxu0 0
    %1924 = vmatpush1.bf16.msra.mxu0 0
    %1925 = vmatprep.subr.bf16.mxu0 0
    %1926 = vmatpush1.bf16.msra.mxu0 0
    %1927 = vmatprep.subr.bf16.mxu0 0
    %1928 = vmatpush1.bf16.msra.mxu0 0
    %1929 = vmatprep.subr.bf16.mxu0 0
    %1930 = vmatpush1.bf16.msra.mxu0 0
    %1931 = vmatprep.subr.bf16.mxu0 0
    %1932 = vmatpush1.bf16.msra.mxu0 0
    %1933 = vmatprep.mubr.bf16.mxu0 0
    %1934 = vmatmul.mubr.bf16.gmra.mrb[0].mxu0 %v1899
    %v1935 = vpop.f32.mrb[0].mxu0
    %v1936 = vadd.f32 %v1871, %v1935
    %v1937 = vpop.f32.mrb[0].mxu0
    %v1938 = vpop.f32.mrb[0].mxu0
    %v1939 = vadd.f32 %v1871, %v1938
    %v1940 = vpop.f32.mrb[0].mxu0
    %1941 = vdwg.mxu0
    %v1942 = vadd.f32 %v1936, %v1785
    %v1943 = vadd.f32 %v1939, %v1786
    %v1944 = vld [vmem:[%s12] sm:$0x1]
    %v1945 = vld [vmem:[%s13] sm:$0x1]
    %v1946 = vsel %vm1716, %v1942, 0.0
    %1947 = vadd.xlane.f32.xlu0 %v1946
    %v1948 = vpop.xlane.xlu0 %1947
    %v1949 = vsel %vm1716, %v1943, 0.0
    %1950 = vadd.xlane.f32.xlu0 %v1949
    %v1951 = vpop.xlane.xlu0 %1950
    %v1952 = vmul.f32 %v1948, %v1750
    %v1953 = vmul.f32 %v1951, %v1750
    %v1954 = vsub.f32 %v1942, %v1952
    %v1955 = vsub.f32 %v1943, %v1953
    %v1956 = vmul.f32 %v1954, %v1954
    %v1957 = vmul.f32 %v1955, %v1955
    %v1958 = vsel %vm1716, %v1956, 0.0
    %1959 = vadd.xlane.f32.xlu0 %v1958
    %v1960 = vpop.xlane.xlu0 %1959
    %v1961 = vsel %vm1716, %v1957, 0.0
    %1962 = vadd.xlane.f32.xlu0 %v1961
    %v1963 = vpop.xlane.xlu0 %1962
    %v1964 = vmul.f32 %v1960, %v1750
    %v1965 = vmul.f32 %v1963, %v1750
    %v1966 = vadd.f32 %v1964, 1e-05
    %v1967 = vadd.f32 %v1965, 1e-05
    %v1968 = vrsqrt.pop %v1966
    %v1969 = vrsqrt.pop %v1967
    %v1970 = vmul.f32 %v1954, %v1968
    %v1971 = vmul.f32 %v1955, %v1969
    %v1973 = vlaneseq
    %v1974 = vshrl.u32 %v1973, 7
    %v1975 = vsub.s32 0, %v1974
    %v1976 = vrot.slane %v1944, %v1975
    %v1978 = vmul.f32 %v1970, %v1976
    %v1979 = vmul.f32 %v1971, %v1976
    %v1981 = vlaneseq
    %v1982 = vshrl.u32 %v1981, 7
    %v1983 = vsub.s32 0, %v1982
    %v1984 = vrot.slane %v1945, %v1983
    %v1986 = vadd.f32 %v1978, %v1984
    %v1987 = vadd.f32 %v1979, %v1984
    %v1988 = vpack.c.bf16 %v1986, %v1986
    %v1989 = vpack.c.bf16 %v1987, %v1987
    %vm1990 = vcmask 257024
    %1991 = vst.msk [vmem:[#allocation2] sm:$0xf] %vm1990, %v1988
    %1992 = vst.msk [vmem:[#allocation2 + $0x4] sm:$0xf] %vm1990, %v1989
    // Predicated region
    $region58: #{tpu_custom_call.1} parent=1 // pred_check
      _
    $region59: #{tpu_custom_call.1} parent=1 // pred_check_branch
      %1994 = sbr.rel (0) target = $region61
    $region60: #{tpu_custom_call.1} parent=1 // pred_region
      %s1996 = ssub.s32 128, 128
      %1997 = vsyncadd [#allocation3], %s1996
      %s1998 = sshll.u32 [#allocation2], 4
      %s1999 = int_to_ptr.vmem [resolvable:$true] %s1998
      %2004 = dma.vmem_to_hbm [thread:$0]  %s1999, 128, %s14, [#allocation3], 64, 64, 4
    $region61: #{tpu_custom_call.1} parent=1 // pred_fallthru
      _
    // Predicated region
    $region62: #{tpu_custom_call.1} parent=1 // pred_check
      _
    $region63: #{tpu_custom_call.1} parent=1 // pred_check_branch
      %2006 = sbr.rel (0) target = $region65
    $region64: #{tpu_custom_call.1} parent=1 // pred_region
      %2007 = dma.done [#allocation3], 128
    $region65: #{tpu_custom_call.1} parent=1 // pred_fallthru
      _
    %2008 = vsyncpa [#allocation3], 1

</llo_original>
